<compile_context>
chip_gen: v7x
topology: tpu7x:2x2x1
jax: 0.10.0
libtpu: 0.0.40
codegen_flags: <defaults>
</compile_context>

<pallas_src>
import functools

import jax
import jax.numpy as jnp
from jax.experimental import pallas as pl
from jax.experimental.pallas import tpu as pltpu


# --------------------------------------------------------------------------
# Shared math helpers
# --------------------------------------------------------------------------
def _layer_norm(x, w, b, eps=1e-12):
    mu = jnp.mean(x, axis=-1, keepdims=True)
    xc = x - mu
    var = jnp.mean(xc * xc, axis=-1, keepdims=True)
    return xc * jax.lax.rsqrt(var + eps) * w + b


# --------------------------------------------------------------------------
# Fused all-layers kernel: grid = (batch_block, layer)
# --------------------------------------------------------------------------
def _transformer_kernel(h_ref, wattn_ref, w1_ref, w2_ref, vec_ref, out_ref,
                        *, num_heads, q_blk, kv_blk):
    layer = pl.program_id(1)

    # Layer 0: pull this batch-block's slab into the (revisited) output VMEM
    # buffer; it stays resident across the whole layer axis and is written
    # back to HBM only when the batch block changes.
    @pl.when(layer == 0)
    def _():
        out_ref[...] = h_ref[...]

    h3 = out_ref[...]                                   # (Bb, S, E) f32
    Bb, S, E = h3.shape
    H = num_heads
    Dh = E // H
    hidden = w1_ref.shape[-1]
    M = Bb * S

    # Small per-layer vectors: one fused DMA, sliced here.
    vecs = vec_ref[0]                                   # (10, Vpad) f32
    bq, bk, bv, bo = (vecs[i, :E] for i in range(4))
    ln1w, ln1b, ln2w, ln2b = (vecs[i, :E] for i in range(4, 8))
    b1 = vecs[8, :hidden]
    b2 = vecs[9, :E]

    def mm(x_f32, w_bf16):
        # [M,K] @ [K,N] on the MXU; weights are pre-transposed [in,out] bf16
        # so there is no in-kernel transpose.  f32 accumulation.
        return jax.lax.dot_general(
            x_f32.astype(jnp.bfloat16), w_bf16,
            dimension_numbers=(((1,), (0,)), ((), ())),
            preferred_element_type=jnp.float32)

    h2d = h3.reshape(M, E)

    # ---- LayerNorm 1 (module: h = LN1(h)) ----
    h1 = _layer_norm(h2d, ln1w, ln1b)

    # ---- Causal multi-head self-attention (PyTorch MHA semantics) ----
    # Three separate projections (no (S,3E) intermediate / misaligned slices);
    # the 1/sqrt(Dh) scale is already folded into wq/bq.
    q = mm(h1, wattn_ref[0, 0]) + bq
    k = mm(h1, wattn_ref[0, 1]) + bk
    v = mm(h1, wattn_ref[0, 2]) + bv

    # (Bb*S, E) -> (Bb*H, S, Dh): one relayout per operand per layer.
    # TODO(synk): fold the head-major relayout into the weight layout /
    # pltpu.einshape to keep it off the XLU at large E.
    def to_heads(x, dt):
        return (x.reshape(Bb, S, H, Dh).swapaxes(1, 2)
                 .reshape(Bb * H, S, Dh).astype(dt))

    qh = to_heads(q, jnp.bfloat16)
    kh = to_heads(k, jnp.bfloat16)
    vh = to_heads(v, jnp.bfloat16)

    # Flash-style attention: static q-tile x kv-tile loops with online softmax.
    # KV tiles strictly above the causal diagonal are skipped at trace time;
    # the mask is only built for diagonal-crossing tiles.
    BH = Bb * H
    neg_inf = jnp.float32(-jnp.inf)
    o_tiles = []
    for q0 in range(0, S, q_blk):
        q_end = q0 + q_blk - 1
        qt = qh[:, q0:q0 + q_blk]                       # (BH, Tq, Dh)
        m_i = jnp.full((BH, q_blk, 1), neg_inf, jnp.float32)
        l_i = jnp.zeros((BH, q_blk, 1), jnp.float32)
        acc = jnp.zeros((BH, q_blk, Dh), jnp.float32)
        for k0 in range(0, S, kv_blk):
            if k0 > q_end:                              # fully masked -> skip
                continue
            kt = kh[:, k0:k0 + kv_blk]                  # (BH, Tk, Dh)
            vt = vh[:, k0:k0 + kv_blk]
            s = jnp.einsum('bqd,bkd->bqk', qt, kt,
                           preferred_element_type=jnp.float32)
            if k0 + kv_blk - 1 > q0:                    # crosses the diagonal
                row = jax.lax.broadcasted_iota(jnp.int32, (q_blk, kv_blk), 0) + q0
                col = jax.lax.broadcasted_iota(jnp.int32, (q_blk, kv_blk), 1) + k0
                s = jnp.where((col > row)[None], neg_inf, s)
            m_new = jnp.maximum(m_i, jnp.max(s, axis=-1, keepdims=True))
            alpha = jnp.exp(m_i - m_new)
            p = jnp.exp(s - m_new)
            l_i = alpha * l_i + jnp.sum(p, axis=-1, keepdims=True)
            acc = alpha * acc + jnp.einsum(
                'bqk,bkd->bqd', p.astype(jnp.bfloat16), vt,
                preferred_element_type=jnp.float32)
            m_i = m_new
        o_tiles.append(acc / l_i)                       # exact denominator
    o = o_tiles[0] if len(o_tiles) == 1 else jnp.concatenate(o_tiles, axis=1)

    attn = o.reshape(Bb, H, S, Dh).swapaxes(1, 2).reshape(M, E)
    attn = mm(attn, wattn_ref[0, 3]) + bo

    # Residual against the LayerNorm-1 output (module: h = attn + LN1(h)).
    hmid = attn + h1

    # ---- LayerNorm 2 + feed-forward (Linear -> ReLU -> Linear) ----
    h2 = _layer_norm(hmid, ln2w, ln2b)
    f = jnp.maximum(mm(h2, w1_ref[0]) + b1, 0.0)
    f = mm(f, w2_ref[0]) + b2
    hout = f + h2

    out_ref[...] = hout.reshape(Bb, S, E).astype(out_ref.dtype)


# --------------------------------------------------------------------------
# Wrapper / tiling heuristics
# --------------------------------------------------------------------------
def _round_up(x, m):
    return (x + m - 1) // m * m


def _largest_divisor_at_most(n, cap):
    t = max(1, min(cap, n))
    while n % t:
        t -= 1
    return t


def _choose_batch_block(B, S, E, hidden):
    # Largest divisor of B whose activation slab stays within a small VMEM
    # budget; larger Bb amortizes per-layer weight DMA over more rows.
    # TODO(synk): on v7x (2 TCs) prefer a Bb that leaves >=2 parallel blocks.
    budget = 2 << 20
    bb = B
    while bb > 1 and (B % bb or bb * S * max(E, hidden) * 4 > budget):
        bb -= 1
    return bb


def _vmem_limit_bytes(Bb, S, E, hidden, num_heads, vpad, q_blk, kv_blk):
    bf16, f32 = 2, 4
    weights = (4 * E * E + 2 * E * hidden) * bf16 + 10 * vpad * f32
    h_io = 2 * Bb * S * E * f32
    act = Bb * S * (8 * E + hidden) * f32                 # h1/q/k/v/attn/f/...
    flash = Bb * num_heads * q_blk * (2 * kv_blk + 2 * (E // num_heads)) * f32
    est = 2 * (weights + h_io) + act + flash               # 2x: double buffering
    est = 2 * est + (8 << 20)                               # compiler headroom
    try:
        cap = int(getattr(pltpu.get_tpu_info(), "vmem_capacity_bytes", 64 << 20))
    except Exception:                                       # pragma: no cover
        cap = 64 << 20
    cap = max(cap - (16 << 20), 32 << 20)                   # ~48 MiB v7x, ~112 MiB v6e
    return int(min(max(est, 32 << 20), cap))


def run_layers(h, w_attn, w1, w2, vecs, num_heads):
    B, S, E = h.shape
    L = w_attn.shape[0]
    hidden = w1.shape[-1]
    vpad = vecs.shape[-1]

    Bb = _choose_batch_block(B, S, E, hidden)
    # 128-aligned flash tiles (MXU/lane width); single tile when S <= 128.
    q_blk = _largest_divisor_at_most(S, 128)
    kv_blk = _largest_divisor_at_most(S, 128)

    kernel = functools.partial(_transformer_kernel, num_heads=num_heads,
                               q_blk=q_blk, kv_blk=kv_blk)
    return pl.pallas_call(
        kernel,
        out_shape=jax.ShapeDtypeStruct((B, S, E), jnp.float32),
        grid_spec=pltpu.PrefetchScalarGridSpec(
            num_scalar_prefetch=0,
            grid=(B // Bb, L),
            in_specs=[
                pl.BlockSpec((Bb, S, E), lambda b, l: (b, 0, 0)),
                pl.BlockSpec((1, 4, E, E), lambda b, l: (l, 0, 0, 0)),
                pl.BlockSpec((1, E, hidden), lambda b, l: (l, 0, 0)),
                pl.BlockSpec((1, hidden, E), lambda b, l: (l, 0, 0)),
                pl.BlockSpec((1, 10, vpad), lambda b, l: (l, 0, 0)),
            ],
            out_specs=pl.BlockSpec((Bb, S, E), lambda b, l: (b, 0, 0)),
        ),
        input_output_aliases={0: 0},            # h HBM buffer reused for output
        compiler_params=pltpu.CompilerParams(
            dimension_semantics=("parallel", "arbitrary"),
            vmem_limit_bytes=_vmem_limit_bytes(Bb, S, E, hidden, num_heads,
                                               vpad, q_blk, kv_blk)),
    )(h, w_attn, w1, w2, vecs)


# --------------------------------------------------------------------------
# Parameter construction: weights pre-transposed to [in,out] bf16, Q scale
# folded in, attention weights packed (L,4,E,E), small vectors packed
# (L,10,Vpad).
# --------------------------------------------------------------------------
def init_params(key, num_embeddings, embed_dim, num_layers, num_heads, hidden_dim):
    E, Hd, L, H = embed_dim, hidden_dim, num_layers, num_heads
    Dh = E // H
    ks = jax.random.split(key, 12)

    def nrm(k, shape, s=0.05):
        return jax.random.normal(k, shape, jnp.float32) * s

    wq, wk, wv, wo = (nrm(ks[i], (L, E, E)) for i in range(4))
    bq, bk, bv = (nrm(ks[4 + i], (L, E)) for i in range(3))
    bo = jnp.zeros((L, E), jnp.float32)
    w1 = nrm(ks[7], (L, E, Hd))
    b1 = nrm(ks[8], (L, Hd))
    w2 = nrm(ks[9], (L, Hd, E))
    b2 = jnp.zeros((L, E), jnp.float32)
    ln1w = jnp.ones((L, E), jnp.float32)
    ln1b = jnp.zeros((L, E), jnp.float32)
    ln2w = jnp.ones((L, E), jnp.float32)
    ln2b = jnp.zeros((L, E), jnp.float32)

    # Fold the attention 1/sqrt(Dh) scale into the Q projection (weight+bias).
    scale = 1.0 / float(Dh) ** 0.5
    wq, bq = wq * scale, bq * scale

    w_attn = jnp.stack([wq, wk, wv, wo], axis=1).astype(jnp.bfloat16)  # (L,4,E,E)

    vpad = _round_up(max(E, Hd), 128)

    def pad(v):
        return jnp.pad(v, ((0, 0), (0, vpad - v.shape[-1])))

    vecs = jnp.stack([pad(x) for x in
                      (bq, bk, bv, bo, ln1w, ln1b, ln2w, ln2b, b1, b2)],
                     axis=1)                                           # (L,10,Vpad)

    return dict(
        tok_emb=jax.random.normal(ks[10], (num_embeddings, E), jnp.float32) * 0.02,
        pos_emb=jax.random.normal(ks[11], (num_embeddings, E), jnp.float32) * 0.02,
        w_attn=w_attn,
        w1=w1.astype(jnp.bfloat16),
        w2=w2.astype(jnp.bfloat16),
        vecs=vecs,
    )


def transformer_forward(tokens, params, num_heads):
    """tokens: int32 [B, S].  Returns float32 [B, S, E]."""
    _, S = tokens.shape
    # Embedding lookups are plain-JAX gather glue (outside the kernel).
    h = params["tok_emb"][tokens]
    h = h + params["pos_emb"][jnp.arange(S)][None, :, :]
    # dropout == identity (inference semantics)
    return run_layers(h.astype(jnp.float32), params["w_attn"],
                      params["w1"], params["w2"], params["vecs"], num_heads)


# --------------------------------------------------------------------------
# Pure-JAX reference (mirrors the kernel's dtype policy) for self-check.
# --------------------------------------------------------------------------
def _reference_forward(tokens, params, num_heads):
    E = params["tok_emb"].shape[-1]
    H = num_heads
    Dh = E // H
    B, S = tokens.shape
    w_attn, w1, w2, vecs = (params["w_attn"], params["w1"],
                            params["w2"], params["vecs"])
    L = w_attn.shape[0]
    hidden = w1.shape[-1]

    def mm(x, w):
        return jnp.dot(x.astype(jnp.bfloat16), w,
                       preferred_element_type=jnp.float32)

    h = params["tok_emb"][tokens] + params["pos_emb"][jnp.arange(S)][None]
    h = h.astype(jnp.float32)
    mask = jnp.triu(jnp.ones((S, S), bool), k=1)
    for l in range(L):
        bq, bk, bv, bo = (vecs[l, i, :E] for i in range(4))
        ln1w, ln1b, ln2w, ln2b = (vecs[l, i, :E] for i in range(4, 8))
        b1 = vecs[l, 8, :hidden]
        b2 = vecs[l, 9, :E]
        h1 = _layer_norm(h, ln1w, ln1b)
        q = mm(h1, w_attn[l, 0]) + bq
        k = mm(h1, w_attn[l, 1]) + bk
        v = mm(h1, w_attn[l, 2]) + bv
        qh = q.reshape(B, S, H, Dh).transpose(0, 2, 1, 3).astype(jnp.bfloat16)
        kh = k.reshape(B, S, H, Dh).transpose(0, 2, 1, 3).astype(jnp.bfloat16)
        vh = v.reshape(B, S, H, Dh).transpose(0, 2, 1, 3).astype(jnp.bfloat16)
        s = jnp.einsum('bhqd,bhkd->bhqk', qh, kh,
                       preferred_element_type=jnp.float32)
        s = jnp.where(mask[None, None], -jnp.inf, s)
        m = jnp.max(s, axis=-1, keepdims=True)
        p = jnp.exp(s - m)
        den = jnp.sum(p, axis=-1, keepdims=True)
        o = jnp.einsum('bhqk,bhkd->bhqd', p.astype(jnp.bfloat16), vh,
                       preferred_element_type=jnp.float32) / den
        attn = o.transpose(0, 2, 1, 3).reshape(B, S, E)
        attn = mm(attn, w_attn[l, 3]) + bo
        h = attn + h1
        h2 = _layer_norm(h, ln2w, ln2b)
        f = jnp.maximum(mm(h2, w1[l]) + b1, 0.0)
        f = mm(f, w2[l]) + b2
        h = f + h2
    return h


if __name__ == "__main__":
    num_embeddings = 64
    embed_dim = 32
    num_layers = 2
    num_heads = 4
    hidden_dim = 64
    batch = 2
    seq = 8

    key = jax.random.PRNGKey(0)
    pkey, tkey = jax.random.split(key)
    params = init_params(pkey, num_embeddings, embed_dim,
                         num_layers, num_heads, hidden_dim)
    tokens = jax.random.randint(tkey, (batch, seq), 0, num_embeddings, jnp.int32)

    out = transformer_forward(tokens, params, num_heads)
    out = jax.block_until_ready(out)
    assert out.shape == (batch, seq, embed_dim)
    assert bool(jnp.all(jnp.isfinite(out)))

    ref = jax.block_until_ready(_reference_forward(tokens, params, num_heads))
    max_err = float(jnp.max(jnp.abs(out - ref)))
    assert max_err < 2e-2, f"kernel vs reference max abs err {max_err}"

    print("KERNEL_OK")
</pallas_src>

<mosaic_0001>
module attributes {stable_mosaic.version = 11 : i64} {
  func.func @_transformer_kernel(%arg0: i32, %arg1: i32, %arg2: memref<2x8x32xf32, #tpu.memory_space<vmem>>, %arg3: memref<1x4x32x32xbf16, #tpu.memory_space<vmem>>, %arg4: memref<1x32x64xbf16, #tpu.memory_space<vmem>>, %arg5: memref<1x64x32xbf16, #tpu.memory_space<vmem>>, %arg6: memref<1x10x128xf32, #tpu.memory_space<vmem>>, %arg7: memref<2x8x32xf32, #tpu.memory_space<vmem>>) attributes {dimension_semantics = [#tpu.dimension_semantics<parallel>, #tpu.dimension_semantics<arbitrary>], iteration_bounds = array<i64: 1, 2>, scalar_prefetch = 0 : i64, scratch_operands = 0 : i64, tpu.core_type = #tpu.core_type<tc>, window_params = [{transform_indices = @transform_0, window_bounds = array<i64: 2, 8, 32>}, {transform_indices = @transform_1, window_bounds = array<i64: 1, 4, 32, 32>}, {transform_indices = @transform_2, window_bounds = array<i64: 1, 32, 64>}, {transform_indices = @transform_3, window_bounds = array<i64: 1, 64, 32>}, {transform_indices = @transform_4, window_bounds = array<i64: 1, 10, 128>}, {transform_indices = @transform_5, window_bounds = array<i64: 2, 8, 32>}]} {
    %c0_i32 = arith.constant 0 : i32
    %0 = arith.cmpi eq, %arg1, %c0_i32 : i32
    %1 = arith.extui %0 : i1 to i32
    %c0_i32_0 = arith.constant 0 : i32
    %2 = arith.cmpi ne, %1, %c0_i32_0 : i32
    scf.if %2 {
      %c0_54 = arith.constant 0 : index
      %c0_55 = arith.constant 0 : index
      %c0_56 = arith.constant 0 : index
      %169 = vector.load %arg2[%c0_54, %c0_55, %c0_56] : memref<2x8x32xf32, #tpu.memory_space<vmem>>, vector<2x8x32xf32>
      %c0_57 = arith.constant 0 : index
      %c0_58 = arith.constant 0 : index
      %c0_59 = arith.constant 0 : index
      %170 = vector.load %arg7[%c0_57, %c0_58, %c0_59] : memref<2x8x32xf32, #tpu.memory_space<vmem>>, vector<2x8x32xf32>
      tpu.vector_store %arg7[%c0_57, %c0_58, %c0_59], %169 {strides = array<i32>} : memref<2x8x32xf32, #tpu.memory_space<vmem>>, vector<2x8x32xf32>,
    } else {
    }
    %c0 = arith.constant 0 : index
    %c0_1 = arith.constant 0 : index
    %c0_2 = arith.constant 0 : index
    %3 = vector.load %arg7[%c0, %c0_1, %c0_2] : memref<2x8x32xf32, #tpu.memory_space<vmem>>, vector<2x8x32xf32>
    %c0_3 = arith.constant 0 : index
    %c0_4 = arith.constant 0 : index
    %c0_5 = arith.constant 0 : index
    %4 = vector.load %arg6[%c0_3, %c0_4, %c0_5] : memref<1x10x128xf32, #tpu.memory_space<vmem>>, vector<1x10x128xf32>
    %5 = vector.shape_cast %4 : vector<1x10x128xf32> to vector<10x128xf32>
    %6 = vector.extract_strided_slice %5 {offsets = [0, 0], sizes = [1, 32], strides = [1, 1]} : vector<10x128xf32> to vector<1x32xf32>
    %7 = vector.shape_cast %6 : vector<1x32xf32> to vector<32xf32>
    %8 = vector.extract_strided_slice %5 {offsets = [1, 0], sizes = [1, 32], strides = [1, 1]} : vector<10x128xf32> to vector<1x32xf32>
    %9 = vector.shape_cast %8 : vector<1x32xf32> to vector<32xf32>
    %10 = vector.extract_strided_slice %5 {offsets = [2, 0], sizes = [1, 32], strides = [1, 1]} : vector<10x128xf32> to vector<1x32xf32>
    %11 = vector.shape_cast %10 : vector<1x32xf32> to vector<32xf32>
    %12 = vector.extract_strided_slice %5 {offsets = [3, 0], sizes = [1, 32], strides = [1, 1]} : vector<10x128xf32> to vector<1x32xf32>
    %13 = vector.shape_cast %12 : vector<1x32xf32> to vector<32xf32>
    %14 = vector.extract_strided_slice %5 {offsets = [4, 0], sizes = [1, 32], strides = [1, 1]} : vector<10x128xf32> to vector<1x32xf32>
    %15 = vector.shape_cast %14 : vector<1x32xf32> to vector<32xf32>
    %16 = vector.extract_strided_slice %5 {offsets = [5, 0], sizes = [1, 32], strides = [1, 1]} : vector<10x128xf32> to vector<1x32xf32>
    %17 = vector.shape_cast %16 : vector<1x32xf32> to vector<32xf32>
    %18 = vector.extract_strided_slice %5 {offsets = [6, 0], sizes = [1, 32], strides = [1, 1]} : vector<10x128xf32> to vector<1x32xf32>
    %19 = vector.shape_cast %18 : vector<1x32xf32> to vector<32xf32>
    %20 = vector.extract_strided_slice %5 {offsets = [7, 0], sizes = [1, 32], strides = [1, 1]} : vector<10x128xf32> to vector<1x32xf32>
    %21 = vector.shape_cast %20 : vector<1x32xf32> to vector<32xf32>
    %22 = vector.extract_strided_slice %5 {offsets = [8, 0], sizes = [1, 64], strides = [1, 1]} : vector<10x128xf32> to vector<1x64xf32>
    %23 = vector.shape_cast %22 : vector<1x64xf32> to vector<64xf32>
    %24 = vector.extract_strided_slice %5 {offsets = [9, 0], sizes = [1, 32], strides = [1, 1]} : vector<10x128xf32> to vector<1x32xf32>
    %25 = vector.shape_cast %24 : vector<1x32xf32> to vector<32xf32>
    %26 = vector.shape_cast %3 : vector<2x8x32xf32> to vector<16x32xf32>
    %cst = arith.constant dense<0.000000e+00> : vector<16xf32>
    %27 = vector.multi_reduction <add>, %26, %cst [1] : vector<16x32xf32> to vector<16xf32>
    %28 = vector.shape_cast %27 : vector<16xf32> to vector<16x1xf32>
    %cst_6 = arith.constant 3.200000e+01 : f32
    %29 = vector.broadcast %cst_6 : f32 to vector<16x1xf32>
    %30 = arith.divf %28, %29 : vector<16x1xf32>
    %31 = vector.broadcast %30 : vector<16x1xf32> to vector<16x32xf32>
    %32 = arith.subf %26, %31 : vector<16x32xf32>
    %33 = arith.mulf %32, %32 : vector<16x32xf32>
    %cst_7 = arith.constant dense<0.000000e+00> : vector<16xf32>
    %34 = vector.multi_reduction <add>, %33, %cst_7 [1] : vector<16x32xf32> to vector<16xf32>
    %35 = vector.shape_cast %34 : vector<16xf32> to vector<16x1xf32>
    %cst_8 = arith.constant 3.200000e+01 : f32
    %36 = vector.broadcast %cst_8 : f32 to vector<16x1xf32>
    %37 = arith.divf %35, %36 : vector<16x1xf32>
    %cst_9 = arith.constant 9.99999996E-13 : f32
    %38 = vector.broadcast %cst_9 : f32 to vector<16x1xf32>
    %39 = arith.addf %37, %38 : vector<16x1xf32>
    %40 = math.rsqrt %39 : vector<16x1xf32>
    %41 = vector.broadcast %40 : vector<16x1xf32> to vector<16x32xf32>
    %42 = arith.mulf %32, %41 : vector<16x32xf32>
    %43 = vector.shape_cast %15 : vector<32xf32> to vector<1x32xf32>
    %44 = vector.broadcast %43 : vector<1x32xf32> to vector<16x32xf32>
    %45 = arith.mulf %42, %44 : vector<16x32xf32>
    %46 = vector.shape_cast %17 : vector<32xf32> to vector<1x32xf32>
    %47 = vector.broadcast %46 : vector<1x32xf32> to vector<16x32xf32>
    %48 = arith.addf %45, %47 : vector<16x32xf32>
    %c0_10 = arith.constant 0 : index
    %c0_11 = arith.constant 0 : index
    %c0_12 = arith.constant 0 : index
    %c0_13 = arith.constant 0 : index
    %49 = vector.load %arg3[%c0_10, %c0_11, %c0_12, %c0_13] : memref<1x4x32x32xbf16, #tpu.memory_space<vmem>>, vector<1x1x32x32xbf16>
    %50 = vector.shape_cast %49 : vector<1x1x32x32xbf16> to vector<32x32xbf16>
    %51 = arith.truncf %48 : vector<16x32xf32> to vector<16x32xbf16>
    %cst_14 = arith.constant dense<0.000000e+00> : vector<16x32xf32>
    %52 = tpu.matmul %51, %50, %cst_14 {dimension_numbers = #tpu.dot_dimension_numbers<[1], [0], [0], [1], [0, 0, 1, 1], [], []>} : vector<16x32xbf16>, vector<32x32xbf16>, vector<16x32xf32> -> vector<16x32xf32>
    %53 = vector.shape_cast %7 : vector<32xf32> to vector<1x32xf32>
    %54 = vector.broadcast %53 : vector<1x32xf32> to vector<16x32xf32>
    %55 = arith.addf %52, %54 : vector<16x32xf32>
    %c0_15 = arith.constant 0 : index
    %c1 = arith.constant 1 : index
    %c0_16 = arith.constant 0 : index
    %c0_17 = arith.constant 0 : index
    %56 = vector.load %arg3[%c0_15, %c1, %c0_16, %c0_17] : memref<1x4x32x32xbf16, #tpu.memory_space<vmem>>, vector<1x1x32x32xbf16>
    %57 = vector.shape_cast %56 : vector<1x1x32x32xbf16> to vector<32x32xbf16>
    %58 = arith.truncf %48 : vector<16x32xf32> to vector<16x32xbf16>
    %cst_18 = arith.constant dense<0.000000e+00> : vector<16x32xf32>
    %59 = tpu.matmul %58, %57, %cst_18 {dimension_numbers = #tpu.dot_dimension_numbers<[1], [0], [0], [1], [0, 0, 1, 1], [], []>} : vector<16x32xbf16>, vector<32x32xbf16>, vector<16x32xf32> -> vector<16x32xf32>
    %60 = vector.shape_cast %9 : vector<32xf32> to vector<1x32xf32>
    %61 = vector.broadcast %60 : vector<1x32xf32> to vector<16x32xf32>
    %62 = arith.addf %59, %61 : vector<16x32xf32>
    %c0_19 = arith.constant 0 : index
    %c2 = arith.constant 2 : index
    %c0_20 = arith.constant 0 : index
    %c0_21 = arith.constant 0 : index
    %63 = vector.load %arg3[%c0_19, %c2, %c0_20, %c0_21] : memref<1x4x32x32xbf16, #tpu.memory_space<vmem>>, vector<1x1x32x32xbf16>
    %64 = vector.shape_cast %63 : vector<1x1x32x32xbf16> to vector<32x32xbf16>
    %65 = arith.truncf %48 : vector<16x32xf32> to vector<16x32xbf16>
    %cst_22 = arith.constant dense<0.000000e+00> : vector<16x32xf32>
    %66 = tpu.matmul %65, %64, %cst_22 {dimension_numbers = #tpu.dot_dimension_numbers<[1], [0], [0], [1], [0, 0, 1, 1], [], []>} : vector<16x32xbf16>, vector<32x32xbf16>, vector<16x32xf32> -> vector<16x32xf32>
    %67 = vector.shape_cast %11 : vector<32xf32> to vector<1x32xf32>
    %68 = vector.broadcast %67 : vector<1x32xf32> to vector<16x32xf32>
    %69 = arith.addf %66, %68 : vector<16x32xf32>
    %70 = vector.shape_cast %55 : vector<16x32xf32> to vector<2x8x4x8xf32>
    %71 = tpu.transpose %70, [0, 2, 1, 3] : vector<2x8x4x8xf32> -> vector<2x4x8x8xf32>
    %72 = vector.shape_cast %71 : vector<2x4x8x8xf32> to vector<8x8x8xf32>
    %73 = arith.truncf %72 : vector<8x8x8xf32> to vector<8x8x8xbf16>
    %74 = vector.shape_cast %62 : vector<16x32xf32> to vector<2x8x4x8xf32>
    %75 = tpu.transpose %74, [0, 2, 1, 3] : vector<2x8x4x8xf32> -> vector<2x4x8x8xf32>
    %76 = vector.shape_cast %75 : vector<2x4x8x8xf32> to vector<8x8x8xf32>
    %77 = arith.truncf %76 : vector<8x8x8xf32> to vector<8x8x8xbf16>
    %78 = vector.shape_cast %69 : vector<16x32xf32> to vector<2x8x4x8xf32>
    %79 = tpu.transpose %78, [0, 2, 1, 3] : vector<2x8x4x8xf32> -> vector<2x4x8x8xf32>
    %80 = vector.shape_cast %79 : vector<2x4x8x8xf32> to vector<8x8x8xf32>
    %81 = arith.truncf %80 : vector<8x8x8xf32> to vector<8x8x8xbf16>
    %cst_23 = arith.constant 0xFF800000 : f32
    %82 = vector.broadcast %cst_23 : f32 to vector<8x8x1xf32>
    %cst_24 = arith.constant 0.000000e+00 : f32
    %83 = vector.broadcast %cst_24 : f32 to vector<8x8x1xf32>
    %cst_25 = arith.constant 0.000000e+00 : f32
    %84 = vector.broadcast %cst_25 : f32 to vector<8x8x8xf32>
    "tpu.trace_start"() <{level = 10 : i32, message = "bqd,bkd->bqk"}> : () -> ()
    %cst_26 = arith.constant dense<0.000000e+00> : vector<8x8x8xf32>
    %85 = tpu.matmul %73, %77, %cst_26 {dimension_numbers = #tpu.dot_dimension_numbers<[2], [2], [1], [1], [0, 0, 0, 1, 1, 1], [0], [0]>} : vector<8x8x8xbf16>, vector<8x8x8xbf16>, vector<8x8x8xf32> -> vector<8x8x8xf32>
    "tpu.trace_stop"() : () -> ()
    %86 = tpu.iota {dimensions = array<i32: 0>} : vector<8x8xi32>
    %c0_i32_27 = arith.constant 0 : i32
    %87 = vector.broadcast %c0_i32_27 : i32 to vector<8x8xi32>
    %88 = arith.addi %86, %87 : vector<8x8xi32>
    %89 = tpu.iota {dimensions = array<i32: 1>} : vector<8x8xi32>
    %c0_i32_28 = arith.constant 0 : i32
    %90 = vector.broadcast %c0_i32_28 : i32 to vector<8x8xi32>
    %91 = arith.addi %89, %90 : vector<8x8xi32>
    %92 = arith.cmpi sgt, %91, %88 : vector<8x8xi32>
    %93 = vector.shape_cast %92 : vector<8x8xi1> to vector<1x8x8xi1>
    %cst_29 = arith.constant 0xFF800000 : f32
    %94 = vector.shape_cast %93 : vector<1x8x8xi1> to vector<1x8x8xi1>
    %95 = vector.broadcast %94 : vector<1x8x8xi1> to vector<8x8x8xi1>
    %96 = vector.broadcast %cst_29 : f32 to vector<8x8x8xf32>
    %97 = arith.select %95, %96, %85 : vector<8x8x8xi1>, vector<8x8x8xf32>
    %cst_30 = arith.constant dense<0xFF800000> : vector<8x8xf32>
    %98 = vector.multi_reduction <maximumf>, %97, %cst_30 [2] : vector<8x8x8xf32> to vector<8x8xf32>
    %99 = vector.shape_cast %98 : vector<8x8xf32> to vector<8x8x1xf32>
    %100 = arith.maximumf %82, %99 : vector<8x8x1xf32>
    %101 = arith.subf %82, %100 : vector<8x8x1xf32>
    %102 = math.exp %101 : vector<8x8x1xf32>
    %103 = vector.broadcast %100 : vector<8x8x1xf32> to vector<8x8x8xf32>
    %104 = arith.subf %97, %103 : vector<8x8x8xf32>
    %105 = math.exp %104 : vector<8x8x8xf32>
    %106 = arith.mulf %102, %83 : vector<8x8x1xf32>
    %cst_31 = arith.constant dense<0.000000e+00> : vector<8x8xf32>
    %107 = vector.multi_reduction <add>, %105, %cst_31 [2] : vector<8x8x8xf32> to vector<8x8xf32>
    %108 = vector.shape_cast %107 : vector<8x8xf32> to vector<8x8x1xf32>
    %109 = arith.addf %106, %108 : vector<8x8x1xf32>
    %110 = vector.broadcast %102 : vector<8x8x1xf32> to vector<8x8x8xf32>
    %111 = arith.mulf %110, %84 : vector<8x8x8xf32>
    %112 = arith.truncf %105 : vector<8x8x8xf32> to vector<8x8x8xbf16>
    "tpu.trace_start"() <{level = 10 : i32, message = "bqk,bkd->bqd"}> : () -> ()
    %cst_32 = arith.constant dense<0.000000e+00> : vector<8x8x8xf32>
    %113 = tpu.matmul %112, %81, %cst_32 {dimension_numbers = #tpu.dot_dimension_numbers<[2], [1], [1], [2], [0, 0, 0, 1, 1, 2], [0], [0]>} : vector<8x8x8xbf16>, vector<8x8x8xbf16>, vector<8x8x8xf32> -> vector<8x8x8xf32>
    "tpu.trace_stop"() : () -> ()
    %114 = arith.addf %111, %113 : vector<8x8x8xf32>
    %115 = vector.broadcast %109 : vector<8x8x1xf32> to vector<8x8x8xf32>
    %116 = arith.divf %114, %115 : vector<8x8x8xf32>
    %117 = vector.shape_cast %116 : vector<8x8x8xf32> to vector<2x4x8x8xf32>
    %118 = tpu.transpose %117, [0, 2, 1, 3] : vector<2x4x8x8xf32> -> vector<2x8x4x8xf32>
    %119 = vector.shape_cast %118 : vector<2x8x4x8xf32> to vector<16x32xf32>
    %c0_33 = arith.constant 0 : index
    %c3 = arith.constant 3 : index
    %c0_34 = arith.constant 0 : index
    %c0_35 = arith.constant 0 : index
    %120 = vector.load %arg3[%c0_33, %c3, %c0_34, %c0_35] : memref<1x4x32x32xbf16, #tpu.memory_space<vmem>>, vector<1x1x32x32xbf16>
    %121 = vector.shape_cast %120 : vector<1x1x32x32xbf16> to vector<32x32xbf16>
    %122 = arith.truncf %119 : vector<16x32xf32> to vector<16x32xbf16>
    %cst_36 = arith.constant dense<0.000000e+00> : vector<16x32xf32>
    %123 = tpu.matmul %122, %121, %cst_36 {dimension_numbers = #tpu.dot_dimension_numbers<[1], [0], [0], [1], [0, 0, 1, 1], [], []>} : vector<16x32xbf16>, vector<32x32xbf16>, vector<16x32xf32> -> vector<16x32xf32>
    %124 = vector.shape_cast %13 : vector<32xf32> to vector<1x32xf32>
    %125 = vector.broadcast %124 : vector<1x32xf32> to vector<16x32xf32>
    %126 = arith.addf %123, %125 : vector<16x32xf32>
    %127 = arith.addf %126, %48 : vector<16x32xf32>
    %cst_37 = arith.constant dense<0.000000e+00> : vector<16xf32>
    %128 = vector.multi_reduction <add>, %127, %cst_37 [1] : vector<16x32xf32> to vector<16xf32>
    %129 = vector.shape_cast %128 : vector<16xf32> to vector<16x1xf32>
    %cst_38 = arith.constant 3.200000e+01 : f32
    %130 = vector.broadcast %cst_38 : f32 to vector<16x1xf32>
    %131 = arith.divf %129, %130 : vector<16x1xf32>
    %132 = vector.broadcast %131 : vector<16x1xf32> to vector<16x32xf32>
    %133 = arith.subf %127, %132 : vector<16x32xf32>
    %134 = arith.mulf %133, %133 : vector<16x32xf32>
    %cst_39 = arith.constant dense<0.000000e+00> : vector<16xf32>
    %135 = vector.multi_reduction <add>, %134, %cst_39 [1] : vector<16x32xf32> to vector<16xf32>
    %136 = vector.shape_cast %135 : vector<16xf32> to vector<16x1xf32>
    %cst_40 = arith.constant 3.200000e+01 : f32
    %137 = vector.broadcast %cst_40 : f32 to vector<16x1xf32>
    %138 = arith.divf %136, %137 : vector<16x1xf32>
    %cst_41 = arith.constant 9.99999996E-13 : f32
    %139 = vector.broadcast %cst_41 : f32 to vector<16x1xf32>
    %140 = arith.addf %138, %139 : vector<16x1xf32>
    %141 = math.rsqrt %140 : vector<16x1xf32>
    %142 = vector.broadcast %141 : vector<16x1xf32> to vector<16x32xf32>
    %143 = arith.mulf %133, %142 : vector<16x32xf32>
    %144 = vector.shape_cast %19 : vector<32xf32> to vector<1x32xf32>
    %145 = vector.broadcast %144 : vector<1x32xf32> to vector<16x32xf32>
    %146 = arith.mulf %143, %145 : vector<16x32xf32>
    %147 = vector.shape_cast %21 : vector<32xf32> to vector<1x32xf32>
    %148 = vector.broadcast %147 : vector<1x32xf32> to vector<16x32xf32>
    %149 = arith.addf %146, %148 : vector<16x32xf32>
    %c0_42 = arith.constant 0 : index
    %c0_43 = arith.constant 0 : index
    %c0_44 = arith.constant 0 : index
    %150 = vector.load %arg4[%c0_42, %c0_43, %c0_44] : memref<1x32x64xbf16, #tpu.memory_space<vmem>>, vector<1x32x64xbf16>
    %151 = vector.shape_cast %150 : vector<1x32x64xbf16> to vector<32x64xbf16>
    %152 = arith.truncf %149 : vector<16x32xf32> to vector<16x32xbf16>
    %cst_45 = arith.constant dense<0.000000e+00> : vector<16x64xf32>
    %153 = tpu.matmul %152, %151, %cst_45 {dimension_numbers = #tpu.dot_dimension_numbers<[1], [0], [0], [1], [0, 0, 1, 1], [], []>} : vector<16x32xbf16>, vector<32x64xbf16>, vector<16x64xf32> -> vector<16x64xf32>
    %154 = vector.shape_cast %23 : vector<64xf32> to vector<1x64xf32>
    %155 = vector.broadcast %154 : vector<1x64xf32> to vector<16x64xf32>
    %156 = arith.addf %153, %155 : vector<16x64xf32>
    %cst_46 = arith.constant 0.000000e+00 : f32
    %157 = vector.broadcast %cst_46 : f32 to vector<16x64xf32>
    %158 = arith.maximumf %156, %157 : vector<16x64xf32>
    %c0_47 = arith.constant 0 : index
    %c0_48 = arith.constant 0 : index
    %c0_49 = arith.constant 0 : index
    %159 = vector.load %arg5[%c0_47, %c0_48, %c0_49] : memref<1x64x32xbf16, #tpu.memory_space<vmem>>, vector<1x64x32xbf16>
    %160 = vector.shape_cast %159 : vector<1x64x32xbf16> to vector<64x32xbf16>
    %161 = arith.truncf %158 : vector<16x64xf32> to vector<16x64xbf16>
    %cst_50 = arith.constant dense<0.000000e+00> : vector<16x32xf32>
    %162 = tpu.matmul %161, %160, %cst_50 {dimension_numbers = #tpu.dot_dimension_numbers<[1], [0], [0], [1], [0, 0, 1, 1], [], []>} : vector<16x64xbf16>, vector<64x32xbf16>, vector<16x32xf32> -> vector<16x32xf32>
    %163 = vector.shape_cast %25 : vector<32xf32> to vector<1x32xf32>
    %164 = vector.broadcast %163 : vector<1x32xf32> to vector<16x32xf32>
    %165 = arith.addf %162, %164 : vector<16x32xf32>
    %166 = arith.addf %165, %149 : vector<16x32xf32>
    %167 = vector.shape_cast %166 : vector<16x32xf32> to vector<2x8x32xf32>
    %c0_51 = arith.constant 0 : index
    %c0_52 = arith.constant 0 : index
    %c0_53 = arith.constant 0 : index
    %168 = vector.load %arg7[%c0_51, %c0_52, %c0_53] : memref<2x8x32xf32, #tpu.memory_space<vmem>>, vector<2x8x32xf32>
    tpu.vector_store %arg7[%c0_51, %c0_52, %c0_53], %167 {strides = array<i32>} : memref<2x8x32xf32, #tpu.memory_space<vmem>>, vector<2x8x32xf32>,
    return
  }
  func.func @transform_0(%arg0: i32, %arg1: i32) -> (i32, i32, i32) {
    %c0_i32 = arith.constant 0 : i32
    %c0_i32_0 = arith.constant 0 : i32
    %c0_i32_1 = arith.constant 0 : i32
    return %arg0, %c0_i32, %c0_i32_0 : i32, i32, i32
  }
  func.func @transform_1(%arg0: i32, %arg1: i32) -> (i32, i32, i32, i32) {
    %c0_i32 = arith.constant 0 : i32
    %c0_i32_0 = arith.constant 0 : i32
    %c0_i32_1 = arith.constant 0 : i32
    %c0_i32_2 = arith.constant 0 : i32
    return %arg1, %c0_i32, %c0_i32_0, %c0_i32_1 : i32, i32, i32, i32
  }
  func.func @transform_2(%arg0: i32, %arg1: i32) -> (i32, i32, i32) {
    %c0_i32 = arith.constant 0 : i32
    %c0_i32_0 = arith.constant 0 : i32
    %c0_i32_1 = arith.constant 0 : i32
    return %arg1, %c0_i32, %c0_i32_0 : i32, i32, i32
  }
  func.func @transform_3(%arg0: i32, %arg1: i32) -> (i32, i32, i32) {
    %c0_i32 = arith.constant 0 : i32
    %c0_i32_0 = arith.constant 0 : i32
    %c0_i32_1 = arith.constant 0 : i32
    return %arg1, %c0_i32, %c0_i32_0 : i32, i32, i32
  }
  func.func @transform_4(%arg0: i32, %arg1: i32) -> (i32, i32, i32) {
    %c0_i32 = arith.constant 0 : i32
    %c0_i32_0 = arith.constant 0 : i32
    %c0_i32_1 = arith.constant 0 : i32
    return %arg1, %c0_i32, %c0_i32_0 : i32, i32, i32
  }
  func.func @transform_5(%arg0: i32, %arg1: i32) -> (i32, i32, i32) {
    %c0_i32 = arith.constant 0 : i32
    %c0_i32_0 = arith.constant 0 : i32
    %c0_i32_1 = arith.constant 0 : i32
    return %arg0, %c0_i32, %c0_i32_0 : i32, i32, i32
  }
}

</mosaic_0001>

<llo_original>
// kernel: tpu_custom_call.1
$region0: #{tpu_custom_call.1}
  #allocation0 [shape = 'u32[]', space=smem, size = 0x4, offset = 0x4, fixed_abs, tag = 'smem constant byte address 0x4 - core index']
  #allocation1 [shape = 'u32[144,128]{1,0:T(1,128)}', space=vmem, size = 0x12000, scoped, tag = 'internal scratch']
  %s0 = inlined_call_operand.hbm [shape: f32[2,8,32], index: 0, kind: input, shape index: {}, may-alias: {0,5}]
  %s1 = inlined_call_operand.vmem [shape: bf16[2,4,32,32], index: 1, kind: input, shape index: {}]
  %s2 = inlined_call_operand.hbm [shape: bf16[2,32,64], index: 2, kind: input, shape index: {}]
  %s3 = inlined_call_operand.vmem [shape: bf16[2,64,32], index: 3, kind: input, shape index: {}]
  %s4 = inlined_call_operand.vmem [shape: f32[2,10,128], index: 4, kind: input, shape index: {}]
  %s5 = inlined_call_operand.hbm [shape: f32[2,8,32], index: 5, kind: output, shape index: {}, may-alias: {0,5}]
  %s6 = sld [smem:[#allocation0]]
  $region65: #{tpu_custom_call.1} parent=0
    _
  %s8 = ssub.s32 1, %s6
  %s9 = scalar_select 0, %s8, %s6
  $region1: #{tpu_custom_call.1} parent=0
    #allocation2 [shape = 'u8[8192]{0}', space=vmem, size = 0x2000, scoped, tag = 'input window, operand 0, single buffered']
    #allocation3 [shape = 's32[2]{0}', space=sflag, size = 0x8, scoped, tag = 'scoped memory for tpu_custom_call.1']
    #allocation4 [shape = 's32[2]{0}', space=sflag, size = 0x8, scoped, tag = 'scoped memory for tpu_custom_call.1']
    #allocation5 [shape = 'u8[16384]{0}', space=vmem, size = 0x4000, scoped, tag = 'input window, operand 2']
    #allocation6 [shape = 's32[2]{0}', space=sflag, size = 0x8, scoped, tag = 'scoped memory for tpu_custom_call.1']
    #allocation7 [shape = 'u8[8192]{0}', space=vmem, size = 0x2000, scoped, tag = 'output window, operand 0, single buffered']
    %10 = vsyncpa [#allocation3], 0
    %11 = vsyncpa [#allocation6], 0
    %s12 = scalar_lea.sflag [#allocation6], 1
    %13 = vsyncpa %s12, 0
    %14 = vsyncpa [#allocation4], 0
    loop: start=0, step=1, limit=4
    $region2: #{tpu_custom_call.1} parent=1 // loop_pre_header
      _
    $region3: #{tpu_custom_call.1} parent=1 // loop_header
      %s16 = sphi 0, %s20
      %p17 = scmp.ge.s32.totalorder %s16, 4
      %s23 = sphi 0, %s35
      %s24 = sphi 0, %s31
      %s25 = sphi 0, %s23
      %s26 = sphi 0, %s24
      %s27 = sphi 0, %s25
      %s28 = sphi 0, %s26
      %s38 = sphi 0, %s40
      %s41 = sphi 0, %s38
      %s42 = sphi 0, %s41
      %s58 = sphi 0, %s42
      %s64 = sphi 0, %s66
      %s67 = sphi 0, %s64
      %s68 = sphi 0, %s67
      %s84 = sphi 0, %s68
      %s90 = sphi 0, %s92
      %s93 = sphi 0, %s90
      %s94 = sphi 0, %s93
      %s110 = sphi 0, %s94
      %s116 = sphi 0, %s118
      %s119 = sphi 0, %s116
      %s120 = sphi 0, %s119
      %s136 = sphi 0, %s120
      %s142 = sphi 0, %s144
      %s145 = sphi 0, %s142
      %s146 = sphi 0, %s145
      %s162 = sphi 0, %s146
      %s168 = sphi 0, %s170
      %s171 = sphi 0, %s168
      %s172 = sphi 0, %s171
      %s188 = sphi 0, %s172
    $region4: #{tpu_custom_call.1} parent=1 // loop_header_branch
      %19 = sbr.rel (%p17) target = $region8
    $region5: #{tpu_custom_call.1} parent=1 // loop_body
      %s21 = ssub.s32 %s16, 1
      %s22 = ssub.s32 %s16, 2
      %s29 = sadd.s32 1, %s24
      %p30 = scmp.ge.s32.totalorder %s29, 2
      %s31 = scalar_select %p30, 0, %s29
      %s32 = sadd.s32 1, %s23
      %s33 = scalar_select %p30, %s32, %s23
      %p34 = scmp.ge.s32.totalorder %s33, 1
      %s35 = scalar_select %p34, 0, %s33
      %s36 = ssub.s32 %s23, %s35
      %p37 = scmp.eq.s32.totalorder %s36, 0
      %s39 = sadd.s32 %s38, 1
      %s40 = scalar_select %p37, %s38, %s39
      %p43 = pneg %p37
      %p44 = scmp.eq.s32.totalorder %s16, 1
      %p45 = por %p43, %p44
      %p46 = scmp.ne.s32.totalorder %s38, %s41
      %p47 = scmp.eq.s32.totalorder %s16, 0
      %p48 = por %p46, %p47
      %p49 = scmp.ne.s32.totalorder %s38, %s41
      %p50 = scmp.eq.s32.totalorder %s21, 1
      %p51 = por %p49, %p50
      %p52 = scmp.ne.s32.totalorder %s41, %s42
      %p53 = scmp.eq.s32.totalorder %s21, 0
      %p54 = por %p52, %p53
      %p55 = scmp.ne.s32.totalorder %s41, %s42
      %p56 = scmp.eq.s32.totalorder %s22, 1
      %p57 = por %p55, %p56
      %p59 = scmp.ne.s32.totalorder %s42, %s58
      %p60 = scmp.eq.s32.totalorder %s22, 0
      %p61 = por %p59, %p60
      %s62 = ssub.s32 %s24, %s31
      %p63 = scmp.eq.s32.totalorder %s62, 0
      %s65 = sadd.s32 %s64, 1
      %s66 = scalar_select %p63, %s64, %s65
      %p69 = pneg %p63
      %p70 = scmp.eq.s32.totalorder %s16, 1
      %p71 = por %p69, %p70
      %p72 = scmp.ne.s32.totalorder %s64, %s67
      %p73 = scmp.eq.s32.totalorder %s16, 0
      %p74 = por %p72, %p73
      %p75 = scmp.ne.s32.totalorder %s64, %s67
      %p76 = scmp.eq.s32.totalorder %s21, 1
      %p77 = por %p75, %p76
      %p78 = scmp.ne.s32.totalorder %s67, %s68
      %p79 = scmp.eq.s32.totalorder %s21, 0
      %p80 = por %p78, %p79
      %p81 = scmp.ne.s32.totalorder %s67, %s68
      %p82 = scmp.eq.s32.totalorder %s22, 1
      %p83 = por %p81, %p82
      %p85 = scmp.ne.s32.totalorder %s68, %s84
      %p86 = scmp.eq.s32.totalorder %s22, 0
      %p87 = por %p85, %p86
      %s88 = ssub.s32 %s24, %s31
      %p89 = scmp.eq.s32.totalorder %s88, 0
      %s91 = sadd.s32 %s90, 1
      %s92 = scalar_select %p89, %s90, %s91
      %p95 = pneg %p89
      %p96 = scmp.eq.s32.totalorder %s16, 1
      %p97 = por %p95, %p96
      %p98 = scmp.ne.s32.totalorder %s90, %s93
      %p99 = scmp.eq.s32.totalorder %s16, 0
      %p100 = por %p98, %p99
      %p101 = scmp.ne.s32.totalorder %s90, %s93
      %p102 = scmp.eq.s32.totalorder %s21, 1
      %p103 = por %p101, %p102
      %p104 = scmp.ne.s32.totalorder %s93, %s94
      %p105 = scmp.eq.s32.totalorder %s21, 0
      %p106 = por %p104, %p105
      %p107 = scmp.ne.s32.totalorder %s93, %s94
      %p108 = scmp.eq.s32.totalorder %s22, 1
      %p109 = por %p107, %p108
      %p111 = scmp.ne.s32.totalorder %s94, %s110
      %p112 = scmp.eq.s32.totalorder %s22, 0
      %p113 = por %p111, %p112
      %s114 = ssub.s32 %s24, %s31
      %p115 = scmp.eq.s32.totalorder %s114, 0
      %s117 = sadd.s32 %s116, 1
      %s118 = scalar_select %p115, %s116, %s117
      %p121 = pneg %p115
      %p122 = scmp.eq.s32.totalorder %s16, 1
      %p123 = por %p121, %p122
      %p124 = scmp.ne.s32.totalorder %s116, %s119
      %p125 = scmp.eq.s32.totalorder %s16, 0
      %p126 = por %p124, %p125
      %p127 = scmp.ne.s32.totalorder %s116, %s119
      %p128 = scmp.eq.s32.totalorder %s21, 1
      %p129 = por %p127, %p128
      %p130 = scmp.ne.s32.totalorder %s119, %s120
      %p131 = scmp.eq.s32.totalorder %s21, 0
      %p132 = por %p130, %p131
      %p133 = scmp.ne.s32.totalorder %s119, %s120
      %p134 = scmp.eq.s32.totalorder %s22, 1
      %p135 = por %p133, %p134
      %p137 = scmp.ne.s32.totalorder %s120, %s136
      %p138 = scmp.eq.s32.totalorder %s22, 0
      %p139 = por %p137, %p138
      %s140 = ssub.s32 %s24, %s31
      %p141 = scmp.eq.s32.totalorder %s140, 0
      %s143 = sadd.s32 %s142, 1
      %s144 = scalar_select %p141, %s142, %s143
      %p147 = pneg %p141
      %p148 = scmp.eq.s32.totalorder %s16, 1
      %p149 = por %p147, %p148
      %p150 = scmp.ne.s32.totalorder %s142, %s145
      %p151 = scmp.eq.s32.totalorder %s16, 0
      %p152 = por %p150, %p151
      %p153 = scmp.ne.s32.totalorder %s142, %s145
      %p154 = scmp.eq.s32.totalorder %s21, 1
      %p155 = por %p153, %p154
      %p156 = scmp.ne.s32.totalorder %s145, %s146
      %p157 = scmp.eq.s32.totalorder %s21, 0
      %p158 = por %p156, %p157
      %p159 = scmp.ne.s32.totalorder %s145, %s146
      %p160 = scmp.eq.s32.totalorder %s22, 1
      %p161 = por %p159, %p160
      %p163 = scmp.ne.s32.totalorder %s146, %s162
      %p164 = scmp.eq.s32.totalorder %s22, 0
      %p165 = por %p163, %p164
      %s166 = ssub.s32 %s23, %s35
      %p167 = scmp.eq.s32.totalorder %s166, 0
      %s169 = sadd.s32 %s168, 1
      %s170 = scalar_select %p167, %s168, %s169
      %p173 = pneg %p167
      %p174 = scmp.eq.s32.totalorder %s16, 1
      %p175 = por %p173, %p174
      %p176 = scmp.ne.s32.totalorder %s168, %s171
      %p177 = scmp.eq.s32.totalorder %s16, 0
      %p178 = por %p176, %p177
      %p179 = scmp.ne.s32.totalorder %s168, %s171
      %p180 = scmp.eq.s32.totalorder %s21, 1
      %p181 = por %p179, %p180
      %p182 = scmp.ne.s32.totalorder %s171, %s172
      %p183 = scmp.eq.s32.totalorder %s21, 0
      %p184 = por %p182, %p183
      %p185 = scmp.ne.s32.totalorder %s171, %s172
      %p186 = scmp.eq.s32.totalorder %s22, 1
      %p187 = por %p185, %p186
      %p189 = scmp.ne.s32.totalorder %s172, %s188
      %p190 = scmp.eq.s32.totalorder %s22, 0
      %p191 = por %p189, %p190
      %p192 = scmp.le.s32.totalorder 1, %s16
      %p193 = scmp.lt.s32.totalorder %s16, 3
      %p194 = pnand %p192, %p193
      %p195 = pneg %p194
      // Predicated region
      $region9: #{tpu_custom_call.1} parent=5 // pred_check
        _
      $region10: #{tpu_custom_call.1} parent=5 // pred_check_branch
        %197 = sbr.rel (%p194) target = $region12
      $region11: #{tpu_custom_call.1} parent=5 // pred_region
        %s198 = ssub.s32 %s16, 1
        // Predicated region
        $region13: #{tpu_custom_call.1} parent=11 // pred_check
          %p199 = pneg %p54
        $region14: #{tpu_custom_call.1} parent=11 // pred_check_branch
          %201 = sbr.rel (%p199) target = $region16
        $region15: #{tpu_custom_call.1} parent=11 // pred_region
          %s202 = smul.u32 2, %s25
          %s204 = ssub.s32 256, 256
          %205 = vsyncadd [#allocation3], %s204
          %s206 = smul.addr %s202, 128
          %s207 = scalar_lea.hbm %s0, %s206
          %s208 = sshll.u32 [#allocation2], 4
          %s209 = int_to_ptr.vmem [resolvable:$true] %s208
          %214 = dma.hbm_to_vmem [thread:$0]  %s207, 256, %s209, [#allocation3], 128, 128, 8
        $region16: #{tpu_custom_call.1} parent=11 // pred_fallthru
          _
      $region12: #{tpu_custom_call.1} parent=5 // pred_fallthru
        _
      %p215 = scmp.lt.s32.totalorder %s16, 2
      // Predicated region
      $region17: #{tpu_custom_call.1} parent=5 // pred_check
        %p216 = pneg %p215
      $region18: #{tpu_custom_call.1} parent=5 // pred_check_branch
        %218 = sbr.rel (%p216) target = $region20
      $region19: #{tpu_custom_call.1} parent=5 // pred_region
        // Predicated region
        $region21: #{tpu_custom_call.1} parent=19 // pred_check
          %p219 = pneg %p74
        $region22: #{tpu_custom_call.1} parent=19 // pred_check_branch
          %221 = sbr.rel (%p219) target = $region24
        $region23: #{tpu_custom_call.1} parent=19 // pred_region
          %p222 = scmp.lt.s32.totalorder %s24, 1
          %s223 = scalar_select %p222, %s24, 1
          %s224 = smul.addr %s223, 16
          %s225 = smul.addr %s224, 4
          %s226 = scalar_lea.vmem %s1, %s225
        $region24: #{tpu_custom_call.1} parent=19 // pred_fallthru
          _
        // Predicated region
        $region25: #{tpu_custom_call.1} parent=19 // pred_check
          %p227 = pneg %p100
        $region26: #{tpu_custom_call.1} parent=19 // pred_check_branch
          %229 = sbr.rel (%p227) target = $region28
        $region27: #{tpu_custom_call.1} parent=19 // pred_region
          %s230 = sand.u32 %s90, 1
          %s231 = scalar_lea.sflag [#allocation6], %s230
          %s232 = sand.u32 %s90, 1
          %s233 = smul.addr %s232, 16
          %s234 = scalar_lea.vmem [#allocation5], %s233
          %s236 = ssub.s32 256, 256
          %237 = vsyncadd %s231, %s236
          %s238 = smul.addr %s24, 4
          %s239 = smul.addr %s238, 64
          %s240 = scalar_lea.hbm %s2, %s239
          %s241 = sshll.u32 %s234, 4
          %s242 = int_to_ptr.vmem [resolvable:$true] %s241
          %247 = dma.hbm_to_vmem [thread:$0]  %s240, 256, %s242, %s231, 64, 64, 4
        $region28: #{tpu_custom_call.1} parent=19 // pred_fallthru
          _
        // Predicated region
        $region29: #{tpu_custom_call.1} parent=19 // pred_check
          %p248 = pneg %p126
        $region30: #{tpu_custom_call.1} parent=19 // pred_check_branch
          %250 = sbr.rel (%p248) target = $region32
        $region31: #{tpu_custom_call.1} parent=19 // pred_region
          %p251 = scmp.lt.s32.totalorder %s24, 1
          %s252 = scalar_select %p251, %s24, 1
          %s253 = smul.addr %s252, 8
          %s254 = smul.addr %s253, 4
          %s255 = scalar_lea.vmem %s3, %s254
        $region32: #{tpu_custom_call.1} parent=19 // pred_fallthru
          _
        // Predicated region
        $region33: #{tpu_custom_call.1} parent=19 // pred_check
          %p256 = pneg %p152
        $region34: #{tpu_custom_call.1} parent=19 // pred_check_branch
          %258 = sbr.rel (%p256) target = $region36
        $region35: #{tpu_custom_call.1} parent=19 // pred_region
          %p259 = scmp.lt.s32.totalorder %s24, 1
          %s260 = scalar_select %p259, %s24, 1
          %s261 = smul.addr %s260, 2
          %s262 = smul.addr %s261, 8
          %s263 = scalar_lea.vmem %s4, %s262
        $region36: #{tpu_custom_call.1} parent=19 // pred_fallthru
          _
      $region20: #{tpu_custom_call.1} parent=5 // pred_fallthru
        _
      %p264 = scmp.le.s32.totalorder 1, %s16
      %p265 = scmp.lt.s32.totalorder %s16, 3
      %p266 = pnand %p264, %p265
      %p267 = pneg %p266
      // Predicated region
      $region37: #{tpu_custom_call.1} parent=5 // pred_check
        _
      $region38: #{tpu_custom_call.1} parent=5 // pred_check_branch
        %269 = sbr.rel (%p266) target = $region40
      $region39: #{tpu_custom_call.1} parent=5 // pred_region
        %s270 = ssub.s32 %s16, 1
        // Predicated region
        $region41: #{tpu_custom_call.1} parent=39 // pred_check
          %p271 = pneg %p54
        $region42: #{tpu_custom_call.1} parent=39 // pred_check_branch
          %273 = sbr.rel (%p271) target = $region44
        $region43: #{tpu_custom_call.1} parent=39 // pred_region
          %274 = dma.done [#allocation3], 256
        $region44: #{tpu_custom_call.1} parent=39 // pred_fallthru
          _
        %s275 = sand.u32 %s93, 1
        %s276 = scalar_lea.sflag [#allocation6], %s275
        %s277 = sand.u32 %s93, 1
        %s278 = smul.addr %s277, 16
        %s279 = scalar_lea.vmem [#allocation5], %s278
        // Predicated region
        $region45: #{tpu_custom_call.1} parent=39 // pred_check
          %p280 = pneg %p106
        $region46: #{tpu_custom_call.1} parent=39 // pred_check_branch
          %282 = sbr.rel (%p280) target = $region48
        $region47: #{tpu_custom_call.1} parent=39 // pred_region
          %283 = dma.done %s276, 256
        $region48: #{tpu_custom_call.1} parent=39 // pred_fallthru
          _
        %p284 = pneg %p54
        %p285 = pneg %p51
        %p286 = scmp.lt.s32.totalorder %s26, 1
        %s287 = scalar_select %p286, %s26, 1
        %s288 = smul.addr %s287, 16
        %s289 = smul.addr %s288, 4
        %s290 = scalar_lea.vmem %s1, %s289
        %p291 = pneg %p80
        %p292 = pneg %p77
        %s293 = sand.u32 %s93, 1
        %s294 = scalar_lea.sflag [#allocation6], %s293
        %s295 = sand.u32 %s93, 1
        %s296 = smul.addr %s295, 16
        %s297 = scalar_lea.vmem [#allocation5], %s296
        %p298 = pneg %p106
        %p299 = pneg %p103
        %p300 = scmp.lt.s32.totalorder %s26, 1
        %s301 = scalar_select %p300, %s26, 1
        %s302 = smul.addr %s301, 8
        %s303 = smul.addr %s302, 4
        %s304 = scalar_lea.vmem %s3, %s303
        %p305 = pneg %p132
        %p306 = pneg %p129
        %p307 = scmp.lt.s32.totalorder %s26, 1
        %s308 = scalar_select %p307, %s26, 1
        %s309 = smul.addr %s308, 2
        %s310 = smul.addr %s309, 8
        %s311 = scalar_lea.vmem %s4, %s310
        %p312 = pneg %p158
        %p313 = pneg %p155
        %p314 = pneg %p184
        %p315 = pneg %p181
        %s316 = smul.u32 2, %s25
        %p317 = scmp.lt.s32.totalorder %s26, 1
        %s318 = scalar_select %p317, %s26, 1
        %s319 = smul.addr %s318, 16
        %s320 = smul.addr %s319, 4
        %s321 = scalar_lea.vmem %s1, %s320
        %p322 = scmp.lt.s32.totalorder %s26, 1
        %s323 = scalar_select %p322, %s26, 1
        %s324 = smul.addr %s323, 8
        %s325 = smul.addr %s324, 4
        %s326 = scalar_lea.vmem %s3, %s325
        %p327 = scmp.lt.s32.totalorder %s26, 1
        %s328 = scalar_select %p327, %s26, 1
        %s329 = smul.addr %s328, 2
        %s330 = smul.addr %s329, 8
        %s331 = scalar_lea.vmem %s4, %s330
        %s332 = smul.u32 2, %s25
        %p334 = scmp.eq.s32.totalorder %s26, 0
        // Predicated region
        $region49: #{tpu_custom_call.1} parent=39 // pred_check
          %p335 = pneg %p334
        $region50: #{tpu_custom_call.1} parent=39 // pred_check_branch
          %337 = sbr.rel (%p335) target = $region52
        $region51: #{tpu_custom_call.1} parent=39 // pred_region
          %v338 = vld [vmem:[#allocation2] sm:$0xff]
          %v339 = vld [vmem:[#allocation2 + $0x8] sm:$0xff]
          %vm340 = vcmask 261120
          %341 = vst.msk [vmem:[#allocation7] sm:$0xff] %vm340, %v338
          %342 = vst.msk [vmem:[#allocation7 + $0x8] sm:$0xff] %vm340, %v339
        $region52: #{tpu_custom_call.1} parent=39 // pred_fallthru
          _
        %v343 = vld [vmem:[#allocation7] sm:$0xff]
        %v344 = vld [vmem:[#allocation7 + $0x8] sm:$0xff]
        %v345 = vld [vmem:[%s331] sm:$0xff]
        %v346 = vld [vmem:[%s331 + $0x8] sm:$0x3]
        %vm347 = vcmask 261120
        %v348 = vsel %vm347, %v343, 0.0
        %349 = vadd.xlane.f32.xlu0 %v348
        %v350 = vpop.xlane.xlu0 %349
        %v351 = vsel %vm347, %v344, 0.0
        %352 = vadd.xlane.f32.xlu0 %v351
        %v353 = vpop.xlane.xlu0 %352
        %v354 = vrcp.pop 32.0
        %v355 = vmul.f32 %v350, %v354
        %v356 = vmul.f32 %v353, %v354
        %v357 = vsub.f32 %v343, %v355
        %v358 = vsub.f32 %v344, %v356
        %v359 = vmul.f32 %v357, %v357
        %v360 = vmul.f32 %v358, %v358
        %v361 = vsel %vm347, %v359, 0.0
        %362 = vadd.xlane.f32.xlu0 %v361
        %v363 = vpop.xlane.xlu0 %362
        %v364 = vsel %vm347, %v360, 0.0
        %365 = vadd.xlane.f32.xlu0 %v364
        %v366 = vpop.xlane.xlu0 %365
        %v367 = vmul.f32 %v363, %v354
        %v368 = vmul.f32 %v366, %v354
        %v369 = vadd.f32 %v367, 1e-12
        %v370 = vadd.f32 %v368, 1e-12
        %v371 = vrsqrt.pop %v369
        %v372 = vrsqrt.pop %v370
        %v373 = vmul.f32 %v357, %v371
        %v374 = vmul.f32 %v358, %v372
        %v375 = vlaneseq
        %v376 = vshrl.u32 %v375, 7
        %v377 = vsub.s32 4, %v376
        %v378 = vrot.slane %v345, %v377
        %v379 = vmul.f32 %v373, %v378
        %v380 = vmul.f32 %v374, %v378
        %v381 = vlaneseq
        %v382 = vshrl.u32 %v381, 7
        %v383 = vsub.s32 5, %v382
        %v384 = vrot.slane %v345, %v383
        %v385 = vadd.f32 %v379, %v384
        %v386 = vadd.f32 %v380, %v384
        %v387 = vld [vmem:[%s321] sm:$0xf]
        %v388 = vld [vmem:[%s321 + $0x4] sm:$0xf]
        %v389 = vld [vmem:[%s321 + $0x8] sm:$0xf]
        %v390 = vld [vmem:[%s321 + $0xc] sm:$0xf]
        %v391 = vpack.c.bf16 %v386, %v385
        %v392 = vlaneseq
        %v393 = vshrl.u32 %v392, 7
        %v394 = vsub.s32 0, %v393
        %v395 = vrot.slane %v345, %v394
        %v400 = vunpack.c.l.b16 %v387
        %v401 = vunpack.c.l.b16 %v388
        %v402 = vunpack.c.l.b16 %v389
        %v403 = vunpack.c.l.b16 %v390
        %v404 = vpack.c.b16 %v401, %v400
        %v405 = vpack.c.b16 %v403, %v402
        %v409 = vsel %vm347, %v391, 0
        %411 = vmatprep.subr.bf16.mxu0 0
        %412 = vmatpush1.bf16.msra.mxu0 %v404
        %413 = vmatprep.subr.bf16.mxu0 0
        %414 = vmatpush1.bf16.msra.mxu0 %v405
        %415 = vmatprep.subr.bf16.mxu0 0
        %416 = vmatpush1.bf16.msra.mxu0 0
        %417 = vmatprep.subr.bf16.mxu0 0
        %418 = vmatpush1.bf16.msra.mxu0 0
        %419 = vmatprep.subr.bf16.mxu0 0
        %420 = vmatpush1.bf16.msra.mxu0 0
        %421 = vmatprep.subr.bf16.mxu0 0
        %422 = vmatpush1.bf16.msra.mxu0 0
        %423 = vmatprep.subr.bf16.mxu0 0
        %424 = vmatpush1.bf16.msra.mxu0 0
        %425 = vmatprep.subr.bf16.mxu0 0
        %426 = vmatpush1.bf16.msra.mxu0 0
        %427 = vmatprep.subr.bf16.mxu0 0
        %428 = vmatpush1.bf16.msra.mxu0 0
        %429 = vmatprep.subr.bf16.mxu0 0
        %430 = vmatpush1.bf16.msra.mxu0 0
        %431 = vmatprep.subr.bf16.mxu0 0
        %432 = vmatpush1.bf16.msra.mxu0 0
        %433 = vmatprep.subr.bf16.mxu0 0
        %434 = vmatpush1.bf16.msra.mxu0 0
        %435 = vmatprep.subr.bf16.mxu0 0
        %436 = vmatpush1.bf16.msra.mxu0 0
        %437 = vmatprep.subr.bf16.mxu0 0
        %438 = vmatpush1.bf16.msra.mxu0 0
        %439 = vmatprep.subr.bf16.mxu0 0
        %440 = vmatpush1.bf16.msra.mxu0 0
        %441 = vmatprep.subr.bf16.mxu0 0
        %442 = vmatpush1.bf16.msra.mxu0 0
        %443 = vmatprep.mubr.bf16.mxu0 0
        %444 = vmatmul.mubr.bf16.gmra.mrb[0].mxu0 %v409
        %v445 = vpop.f32.mrb[0].mxu0
        %v446 = vadd.f32 %v395, %v445
        %v447 = vpop.f32.mrb[0].mxu0
        %v448 = vpop.f32.mrb[0].mxu0
        %v449 = vadd.f32 %v395, %v448
        %v450 = vpop.f32.mrb[0].mxu0
        %451 = vdwg.mxu0
        %s452 = scalar_lea.vmem %s321, 16
        %v453 = vld [vmem:[%s452] sm:$0xf]
        %v454 = vld [vmem:[%s452 + $0x4] sm:$0xf]
        %v455 = vld [vmem:[%s452 + $0x8] sm:$0xf]
        %v456 = vld [vmem:[%s452 + $0xc] sm:$0xf]
        %v457 = vlaneseq
        %v458 = vshrl.u32 %v457, 7
        %v459 = vsub.s32 1, %v458
        %v460 = vrot.slane %v345, %v459
        %v465 = vunpack.c.l.b16 %v453
        %v466 = vunpack.c.l.b16 %v454
        %v467 = vunpack.c.l.b16 %v455
        %v468 = vunpack.c.l.b16 %v456
        %v469 = vpack.c.b16 %v466, %v465
        %v470 = vpack.c.b16 %v468, %v467
        %473 = vmatprep.subr.bf16.mxu0 0
        %474 = vmatpush1.bf16.msra.mxu0 %v469
        %475 = vmatprep.subr.bf16.mxu0 0
        %476 = vmatpush1.bf16.msra.mxu0 %v470
        %477 = vmatprep.subr.bf16.mxu0 0
        %478 = vmatpush1.bf16.msra.mxu0 0
        %479 = vmatprep.subr.bf16.mxu0 0
        %480 = vmatpush1.bf16.msra.mxu0 0
        %481 = vmatprep.subr.bf16.mxu0 0
        %482 = vmatpush1.bf16.msra.mxu0 0
        %483 = vmatprep.subr.bf16.mxu0 0
        %484 = vmatpush1.bf16.msra.mxu0 0
        %485 = vmatprep.subr.bf16.mxu0 0
        %486 = vmatpush1.bf16.msra.mxu0 0
        %487 = vmatprep.subr.bf16.mxu0 0
        %488 = vmatpush1.bf16.msra.mxu0 0
        %489 = vmatprep.subr.bf16.mxu0 0
        %490 = vmatpush1.bf16.msra.mxu0 0
        %491 = vmatprep.subr.bf16.mxu0 0
        %492 = vmatpush1.bf16.msra.mxu0 0
        %493 = vmatprep.subr.bf16.mxu0 0
        %494 = vmatpush1.bf16.msra.mxu0 0
        %495 = vmatprep.subr.bf16.mxu0 0
        %496 = vmatpush1.bf16.msra.mxu0 0
        %497 = vmatprep.subr.bf16.mxu0 0
        %498 = vmatpush1.bf16.msra.mxu0 0
        %499 = vmatprep.subr.bf16.mxu0 0
        %500 = vmatpush1.bf16.msra.mxu0 0
        %501 = vmatprep.subr.bf16.mxu0 0
        %502 = vmatpush1.bf16.msra.mxu0 0
        %503 = vmatprep.subr.bf16.mxu0 0
        %504 = vmatpush1.bf16.msra.mxu0 0
        %505 = vmatprep.mubr.bf16.mxu0 0
        %506 = vmatmul.mubr.bf16.gmra.mrb[0].mxu0 %v409
        %v507 = vpop.f32.mrb[0].mxu0
        %v508 = vadd.f32 %v460, %v507
        %v509 = vpop.f32.mrb[0].mxu0
        %v510 = vpop.f32.mrb[0].mxu0
        %v511 = vadd.f32 %v460, %v510
        %v512 = vpop.f32.mrb[0].mxu0
        %513 = vdwg.mxu0
        %s514 = scalar_lea.vmem %s321, 32
        %v515 = vld [vmem:[%s514] sm:$0xf]
        %v516 = vld [vmem:[%s514 + $0x4] sm:$0xf]
        %v517 = vld [vmem:[%s514 + $0x8] sm:$0xf]
        %v518 = vld [vmem:[%s514 + $0xc] sm:$0xf]
        %v519 = vlaneseq
        %v520 = vshrl.u32 %v519, 7
        %v521 = vsub.s32 2, %v520
        %v522 = vrot.slane %v345, %v521
        %v527 = vunpack.c.l.b16 %v515
        %v528 = vunpack.c.l.b16 %v516
        %v529 = vunpack.c.l.b16 %v517
        %v530 = vunpack.c.l.b16 %v518
        %v531 = vpack.c.b16 %v528, %v527
        %v532 = vpack.c.b16 %v530, %v529
        %535 = vmatprep.subr.bf16.mxu0 0
        %536 = vmatpush1.bf16.msra.mxu0 %v531
        %537 = vmatprep.subr.bf16.mxu0 0
        %538 = vmatpush1.bf16.msra.mxu0 %v532
        %539 = vmatprep.subr.bf16.mxu0 0
        %540 = vmatpush1.bf16.msra.mxu0 0
        %541 = vmatprep.subr.bf16.mxu0 0
        %542 = vmatpush1.bf16.msra.mxu0 0
        %543 = vmatprep.subr.bf16.mxu0 0
        %544 = vmatpush1.bf16.msra.mxu0 0
        %545 = vmatprep.subr.bf16.mxu0 0
        %546 = vmatpush1.bf16.msra.mxu0 0
        %547 = vmatprep.subr.bf16.mxu0 0
        %548 = vmatpush1.bf16.msra.mxu0 0
        %549 = vmatprep.subr.bf16.mxu0 0
        %550 = vmatpush1.bf16.msra.mxu0 0
        %551 = vmatprep.subr.bf16.mxu0 0
        %552 = vmatpush1.bf16.msra.mxu0 0
        %553 = vmatprep.subr.bf16.mxu0 0
        %554 = vmatpush1.bf16.msra.mxu0 0
        %555 = vmatprep.subr.bf16.mxu0 0
        %556 = vmatpush1.bf16.msra.mxu0 0
        %557 = vmatprep.subr.bf16.mxu0 0
        %558 = vmatpush1.bf16.msra.mxu0 0
        %559 = vmatprep.subr.bf16.mxu0 0
        %560 = vmatpush1.bf16.msra.mxu0 0
        %561 = vmatprep.subr.bf16.mxu0 0
        %562 = vmatpush1.bf16.msra.mxu0 0
        %563 = vmatprep.subr.bf16.mxu0 0
        %564 = vmatpush1.bf16.msra.mxu0 0
        %565 = vmatprep.subr.bf16.mxu0 0
        %566 = vmatpush1.bf16.msra.mxu0 0
        %567 = vmatprep.mubr.bf16.mxu0 0
        %568 = vmatmul.mubr.bf16.gmra.mrb[0].mxu0 %v409
        %v569 = vpop.f32.mrb[0].mxu0
        %v570 = vadd.f32 %v522, %v569
        %v571 = vpop.f32.mrb[0].mxu0
        %v572 = vpop.f32.mrb[0].mxu0
        %v573 = vadd.f32 %v522, %v572
        %v574 = vpop.f32.mrb[0].mxu0
        %575 = vdwg.mxu0
        %578 = vrot.lane.b32.xlu0 %v446, 120
        %v579 = vpop.permute.xlu0 %578
        %580 = vrot.lane.b32.xlu0 %v449, 120
        %v581 = vpop.permute.xlu0 %580
        %584 = vrot.lane.b32.xlu0 %v446, 112
        %v585 = vpop.permute.xlu0 %584
        %586 = vrot.lane.b32.xlu0 %v449, 112
        %v587 = vpop.permute.xlu0 %586
        %590 = vrot.lane.b32.xlu0 %v446, 104
        %v591 = vpop.permute.xlu0 %590
        %592 = vrot.lane.b32.xlu0 %v449, 104
        %v593 = vpop.permute.xlu0 %592
        %v596 = vcombine.low %v446, %v585
        %v597 = vcombine.high %v446, %v585
        %v599 = vunpack.c.l.s4 1983009808
        %v600 = vunpack.c.0.s8 %v599
        %v601 = vlaneseq
        %v602 = vshrl.u32 %v601, 7
        %v603 = vsub.s32 %v600, %v602
        %v604 = vrot.slane %v596, %v603
        %v606 = vunpack.c.l.s4 1983009808
        %v607 = vunpack.c.0.s8 %v606
        %v608 = vlaneseq
        %v609 = vshrl.u32 %v608, 7
        %v610 = vsub.s32 %v607, %v609
        %v611 = vrot.slane %v597, %v610
        %v612 = vcombine.low %v579, %v591
        %v613 = vcombine.high %v579, %v591
        %v615 = vunpack.c.l.s4 1983009808
        %v616 = vunpack.c.0.s8 %v615
        %v617 = vlaneseq
        %v618 = vshrl.u32 %v617, 7
        %v619 = vsub.s32 %v616, %v618
        %v620 = vrot.slane %v612, %v619
        %v622 = vunpack.c.l.s4 1983009808
        %v623 = vunpack.c.0.s8 %v622
        %v624 = vlaneseq
        %v625 = vshrl.u32 %v624, 7
        %v626 = vsub.s32 %v623, %v625
        %v627 = vrot.slane %v613, %v626
        %v628 = vcombine.low %v604, %v620
        %v629 = vcombine.high %v604, %v620
        %v631 = vunpack.c.l.s4 1934713408
        %v632 = vunpack.c.0.s8 %v631
        %v633 = vlaneseq
        %v634 = vshrl.u32 %v633, 7
        %v635 = vsub.s32 %v632, %v634
        %v636 = vrot.slane %v628, %v635
        %v638 = vunpack.c.l.s4 1934713408
        %v639 = vunpack.c.0.s8 %v638
        %v640 = vlaneseq
        %v641 = vshrl.u32 %v640, 7
        %v642 = vsub.s32 %v639, %v641
        %v643 = vrot.slane %v629, %v642
        %v644 = vcombine.low %v611, %v627
        %v645 = vcombine.high %v611, %v627
        %v647 = vunpack.c.l.s4 1934713408
        %v648 = vunpack.c.0.s8 %v647
        %v649 = vlaneseq
        %v650 = vshrl.u32 %v649, 7
        %v651 = vsub.s32 %v648, %v650
        %v652 = vrot.slane %v644, %v651
        %v654 = vunpack.c.l.s4 1934713408
        %v655 = vunpack.c.0.s8 %v654
        %v656 = vlaneseq
        %v657 = vshrl.u32 %v656, 7
        %v658 = vsub.s32 %v655, %v657
        %v659 = vrot.slane %v645, %v658
        %v660 = vcombine.high %v636, 0.0
        %v661 = vcombine.high %v643, 0.0
        %v662 = vcombine.high %v652, 0.0
        %v663 = vcombine.high %v659, 0.0
        %v664 = vcombine.low %v449, %v587
        %v665 = vcombine.high %v449, %v587
        %v667 = vunpack.c.l.s4 1983009808
        %v668 = vunpack.c.0.s8 %v667
        %v669 = vlaneseq
        %v670 = vshrl.u32 %v669, 7
        %v671 = vsub.s32 %v668, %v670
        %v672 = vrot.slane %v664, %v671
        %v674 = vunpack.c.l.s4 1983009808
        %v675 = vunpack.c.0.s8 %v674
        %v676 = vlaneseq
        %v677 = vshrl.u32 %v676, 7
        %v678 = vsub.s32 %v675, %v677
        %v679 = vrot.slane %v665, %v678
        %v680 = vcombine.low %v581, %v593
        %v681 = vcombine.high %v581, %v593
        %v683 = vunpack.c.l.s4 1983009808
        %v684 = vunpack.c.0.s8 %v683
        %v685 = vlaneseq
        %v686 = vshrl.u32 %v685, 7
        %v687 = vsub.s32 %v684, %v686
        %v688 = vrot.slane %v680, %v687
        %v690 = vunpack.c.l.s4 1983009808
        %v691 = vunpack.c.0.s8 %v690
        %v692 = vlaneseq
        %v693 = vshrl.u32 %v692, 7
        %v694 = vsub.s32 %v691, %v693
        %v695 = vrot.slane %v681, %v694
        %v696 = vcombine.low %v672, %v688
        %v697 = vcombine.high %v672, %v688
        %v699 = vunpack.c.l.s4 1934713408
        %v700 = vunpack.c.0.s8 %v699
        %v701 = vlaneseq
        %v702 = vshrl.u32 %v701, 7
        %v703 = vsub.s32 %v700, %v702
        %v704 = vrot.slane %v696, %v703
        %v706 = vunpack.c.l.s4 1934713408
        %v707 = vunpack.c.0.s8 %v706
        %v708 = vlaneseq
        %v709 = vshrl.u32 %v708, 7
        %v710 = vsub.s32 %v707, %v709
        %v711 = vrot.slane %v697, %v710
        %v712 = vcombine.low %v679, %v695
        %v713 = vcombine.high %v679, %v695
        %v715 = vunpack.c.l.s4 1934713408
        %v716 = vunpack.c.0.s8 %v715
        %v717 = vlaneseq
        %v718 = vshrl.u32 %v717, 7
        %v719 = vsub.s32 %v716, %v718
        %v720 = vrot.slane %v712, %v719
        %v722 = vunpack.c.l.s4 1934713408
        %v723 = vunpack.c.0.s8 %v722
        %v724 = vlaneseq
        %v725 = vshrl.u32 %v724, 7
        %v726 = vsub.s32 %v723, %v725
        %v727 = vrot.slane %v713, %v726
        %v728 = vcombine.high %v704, 0.0
        %v729 = vcombine.high %v711, 0.0
        %v730 = vcombine.high %v720, 0.0
        %v731 = vcombine.high %v727, 0.0
        %v732 = vcombine.low %v636, %v643
        %v734 = vunpack.c.l.s4 1983009808
        %v735 = vunpack.c.0.s8 %v734
        %v736 = vlaneseq
        %v737 = vshrl.u32 %v736, 7
        %v738 = vsub.s32 %v735, %v737
        %v739 = vrot.slane %v732, %v738
        %v740 = vcombine.low %v660, %v661
        %v742 = vunpack.c.l.s4 1983009808
        %v743 = vunpack.c.0.s8 %v742
        %v744 = vlaneseq
        %v745 = vshrl.u32 %v744, 7
        %v746 = vsub.s32 %v743, %v745
        %v747 = vrot.slane %v740, %v746
        %v748 = vcombine.low %v652, %v659
        %v750 = vunpack.c.l.s4 1983009808
        %v751 = vunpack.c.0.s8 %v750
        %v752 = vlaneseq
        %v753 = vshrl.u32 %v752, 7
        %v754 = vsub.s32 %v751, %v753
        %v755 = vrot.slane %v748, %v754
        %v756 = vcombine.low %v662, %v663
        %v758 = vunpack.c.l.s4 1983009808
        %v759 = vunpack.c.0.s8 %v758
        %v760 = vlaneseq
        %v761 = vshrl.u32 %v760, 7
        %v762 = vsub.s32 %v759, %v761
        %v763 = vrot.slane %v756, %v762
        %v764 = vcombine.low %v739, %v747
        %v765 = vcombine.high %v739, %v747
        %v767 = vunpack.c.l.s4 1934713408
        %v768 = vunpack.c.0.s8 %v767
        %v769 = vlaneseq
        %v770 = vshrl.u32 %v769, 7
        %v771 = vsub.s32 %v768, %v770
        %v772 = vrot.slane %v764, %v771
        %v774 = vunpack.c.l.s4 1934713408
        %v775 = vunpack.c.0.s8 %v774
        %v776 = vlaneseq
        %v777 = vshrl.u32 %v776, 7
        %v778 = vsub.s32 %v775, %v777
        %v779 = vrot.slane %v765, %v778
        %v780 = vcombine.low %v755, %v763
        %v781 = vcombine.high %v755, %v763
        %v783 = vunpack.c.l.s4 1934713408
        %v784 = vunpack.c.0.s8 %v783
        %v785 = vlaneseq
        %v786 = vshrl.u32 %v785, 7
        %v787 = vsub.s32 %v784, %v786
        %v788 = vrot.slane %v780, %v787
        %v790 = vunpack.c.l.s4 1934713408
        %v791 = vunpack.c.0.s8 %v790
        %v792 = vlaneseq
        %v793 = vshrl.u32 %v792, 7
        %v794 = vsub.s32 %v791, %v793
        %v795 = vrot.slane %v781, %v794
        %v796 = vcombine.low %v772, %v788
        %v797 = vcombine.high %v772, %v788
        %v798 = vcombine.low %v779, %v795
        %v799 = vcombine.high %v779, %v795
        %v800 = vcombine.low %v704, %v711
        %v802 = vunpack.c.l.s4 1983009808
        %v803 = vunpack.c.0.s8 %v802
        %v804 = vlaneseq
        %v805 = vshrl.u32 %v804, 7
        %v806 = vsub.s32 %v803, %v805
        %v807 = vrot.slane %v800, %v806
        %v808 = vcombine.low %v728, %v729
        %v810 = vunpack.c.l.s4 1983009808
        %v811 = vunpack.c.0.s8 %v810
        %v812 = vlaneseq
        %v813 = vshrl.u32 %v812, 7
        %v814 = vsub.s32 %v811, %v813
        %v815 = vrot.slane %v808, %v814
        %v816 = vcombine.low %v720, %v727
        %v818 = vunpack.c.l.s4 1983009808
        %v819 = vunpack.c.0.s8 %v818
        %v820 = vlaneseq
        %v821 = vshrl.u32 %v820, 7
        %v822 = vsub.s32 %v819, %v821
        %v823 = vrot.slane %v816, %v822
        %v824 = vcombine.low %v730, %v731
        %v826 = vunpack.c.l.s4 1983009808
        %v827 = vunpack.c.0.s8 %v826
        %v828 = vlaneseq
        %v829 = vshrl.u32 %v828, 7
        %v830 = vsub.s32 %v827, %v829
        %v831 = vrot.slane %v824, %v830
        %v832 = vcombine.low %v807, %v815
        %v833 = vcombine.high %v807, %v815
        %v835 = vunpack.c.l.s4 1934713408
        %v836 = vunpack.c.0.s8 %v835
        %v837 = vlaneseq
        %v838 = vshrl.u32 %v837, 7
        %v839 = vsub.s32 %v836, %v838
        %v840 = vrot.slane %v832, %v839
        %v842 = vunpack.c.l.s4 1934713408
        %v843 = vunpack.c.0.s8 %v842
        %v844 = vlaneseq
        %v845 = vshrl.u32 %v844, 7
        %v846 = vsub.s32 %v843, %v845
        %v847 = vrot.slane %v833, %v846
        %v848 = vcombine.low %v823, %v831
        %v849 = vcombine.high %v823, %v831
        %v851 = vunpack.c.l.s4 1934713408
        %v852 = vunpack.c.0.s8 %v851
        %v853 = vlaneseq
        %v854 = vshrl.u32 %v853, 7
        %v855 = vsub.s32 %v852, %v854
        %v856 = vrot.slane %v848, %v855
        %v858 = vunpack.c.l.s4 1934713408
        %v859 = vunpack.c.0.s8 %v858
        %v860 = vlaneseq
        %v861 = vshrl.u32 %v860, 7
        %v862 = vsub.s32 %v859, %v861
        %v863 = vrot.slane %v849, %v862
        %v864 = vcombine.low %v840, %v856
        %v865 = vcombine.high %v840, %v856
        %v866 = vcombine.low %v847, %v863
        %v867 = vcombine.high %v847, %v863
        %v868 = vpack.c.bf16 %v796, %v796
        %v869 = vpack.c.bf16 %v797, %v797
        %v870 = vpack.c.bf16 %v798, %v798
        %v871 = vpack.c.bf16 %v799, %v799
        %v872 = vpack.c.bf16 %v864, %v864
        %v873 = vpack.c.bf16 %v865, %v865
        %v874 = vpack.c.bf16 %v866, %v866
        %v875 = vpack.c.bf16 %v867, %v867
        %878 = vrot.lane.b32.xlu0 %v508, 120
        %v879 = vpop.permute.xlu0 %878
        %880 = vrot.lane.b32.xlu0 %v511, 120
        %v881 = vpop.permute.xlu0 %880
        %884 = vrot.lane.b32.xlu0 %v508, 112
        %v885 = vpop.permute.xlu0 %884
        %886 = vrot.lane.b32.xlu0 %v511, 112
        %v887 = vpop.permute.xlu0 %886
        %890 = vrot.lane.b32.xlu0 %v508, 104
        %v891 = vpop.permute.xlu0 %890
        %892 = vrot.lane.b32.xlu0 %v511, 104
        %v893 = vpop.permute.xlu0 %892
        %v896 = vcombine.low %v508, %v885
        %v897 = vcombine.high %v508, %v885
        %v899 = vunpack.c.l.s4 1983009808
        %v900 = vunpack.c.0.s8 %v899
        %v901 = vlaneseq
        %v902 = vshrl.u32 %v901, 7
        %v903 = vsub.s32 %v900, %v902
        %v904 = vrot.slane %v896, %v903
        %v906 = vunpack.c.l.s4 1983009808
        %v907 = vunpack.c.0.s8 %v906
        %v908 = vlaneseq
        %v909 = vshrl.u32 %v908, 7
        %v910 = vsub.s32 %v907, %v909
        %v911 = vrot.slane %v897, %v910
        %v912 = vcombine.low %v879, %v891
        %v913 = vcombine.high %v879, %v891
        %v915 = vunpack.c.l.s4 1983009808
        %v916 = vunpack.c.0.s8 %v915
        %v917 = vlaneseq
        %v918 = vshrl.u32 %v917, 7
        %v919 = vsub.s32 %v916, %v918
        %v920 = vrot.slane %v912, %v919
        %v922 = vunpack.c.l.s4 1983009808
        %v923 = vunpack.c.0.s8 %v922
        %v924 = vlaneseq
        %v925 = vshrl.u32 %v924, 7
        %v926 = vsub.s32 %v923, %v925
        %v927 = vrot.slane %v913, %v926
        %v928 = vcombine.low %v904, %v920
        %v929 = vcombine.high %v904, %v920
        %v931 = vunpack.c.l.s4 1934713408
        %v932 = vunpack.c.0.s8 %v931
        %v933 = vlaneseq
        %v934 = vshrl.u32 %v933, 7
        %v935 = vsub.s32 %v932, %v934
        %v936 = vrot.slane %v928, %v935
        %v938 = vunpack.c.l.s4 1934713408
        %v939 = vunpack.c.0.s8 %v938
        %v940 = vlaneseq
        %v941 = vshrl.u32 %v940, 7
        %v942 = vsub.s32 %v939, %v941
        %v943 = vrot.slane %v929, %v942
        %v944 = vcombine.low %v911, %v927
        %v945 = vcombine.high %v911, %v927
        %v947 = vunpack.c.l.s4 1934713408
        %v948 = vunpack.c.0.s8 %v947
        %v949 = vlaneseq
        %v950 = vshrl.u32 %v949, 7
        %v951 = vsub.s32 %v948, %v950
        %v952 = vrot.slane %v944, %v951
        %v954 = vunpack.c.l.s4 1934713408
        %v955 = vunpack.c.0.s8 %v954
        %v956 = vlaneseq
        %v957 = vshrl.u32 %v956, 7
        %v958 = vsub.s32 %v955, %v957
        %v959 = vrot.slane %v945, %v958
        %v960 = vcombine.high %v936, 0.0
        %v961 = vcombine.high %v943, 0.0
        %v962 = vcombine.high %v952, 0.0
        %v963 = vcombine.high %v959, 0.0
        %v964 = vcombine.low %v511, %v887
        %v965 = vcombine.high %v511, %v887
        %v967 = vunpack.c.l.s4 1983009808
        %v968 = vunpack.c.0.s8 %v967
        %v969 = vlaneseq
        %v970 = vshrl.u32 %v969, 7
        %v971 = vsub.s32 %v968, %v970
        %v972 = vrot.slane %v964, %v971
        %v974 = vunpack.c.l.s4 1983009808
        %v975 = vunpack.c.0.s8 %v974
        %v976 = vlaneseq
        %v977 = vshrl.u32 %v976, 7
        %v978 = vsub.s32 %v975, %v977
        %v979 = vrot.slane %v965, %v978
        %v980 = vcombine.low %v881, %v893
        %v981 = vcombine.high %v881, %v893
        %v983 = vunpack.c.l.s4 1983009808
        %v984 = vunpack.c.0.s8 %v983
        %v985 = vlaneseq
        %v986 = vshrl.u32 %v985, 7
        %v987 = vsub.s32 %v984, %v986
        %v988 = vrot.slane %v980, %v987
        %v990 = vunpack.c.l.s4 1983009808
        %v991 = vunpack.c.0.s8 %v990
        %v992 = vlaneseq
        %v993 = vshrl.u32 %v992, 7
        %v994 = vsub.s32 %v991, %v993
        %v995 = vrot.slane %v981, %v994
        %v996 = vcombine.low %v972, %v988
        %v997 = vcombine.high %v972, %v988
        %v999 = vunpack.c.l.s4 1934713408
        %v1000 = vunpack.c.0.s8 %v999
        %v1001 = vlaneseq
        %v1002 = vshrl.u32 %v1001, 7
        %v1003 = vsub.s32 %v1000, %v1002
        %v1004 = vrot.slane %v996, %v1003
        %v1006 = vunpack.c.l.s4 1934713408
        %v1007 = vunpack.c.0.s8 %v1006
        %v1008 = vlaneseq
        %v1009 = vshrl.u32 %v1008, 7
        %v1010 = vsub.s32 %v1007, %v1009
        %v1011 = vrot.slane %v997, %v1010
        %v1012 = vcombine.low %v979, %v995
        %v1013 = vcombine.high %v979, %v995
        %v1015 = vunpack.c.l.s4 1934713408
        %v1016 = vunpack.c.0.s8 %v1015
        %v1017 = vlaneseq
        %v1018 = vshrl.u32 %v1017, 7
        %v1019 = vsub.s32 %v1016, %v1018
        %v1020 = vrot.slane %v1012, %v1019
        %v1022 = vunpack.c.l.s4 1934713408
        %v1023 = vunpack.c.0.s8 %v1022
        %v1024 = vlaneseq
        %v1025 = vshrl.u32 %v1024, 7
        %v1026 = vsub.s32 %v1023, %v1025
        %v1027 = vrot.slane %v1013, %v1026
        %v1028 = vcombine.high %v1004, 0.0
        %v1029 = vcombine.high %v1011, 0.0
        %v1030 = vcombine.high %v1020, 0.0
        %v1031 = vcombine.high %v1027, 0.0
        %v1032 = vcombine.low %v936, %v943
        %v1034 = vunpack.c.l.s4 1983009808
        %v1035 = vunpack.c.0.s8 %v1034
        %v1036 = vlaneseq
        %v1037 = vshrl.u32 %v1036, 7
        %v1038 = vsub.s32 %v1035, %v1037
        %v1039 = vrot.slane %v1032, %v1038
        %v1040 = vcombine.low %v960, %v961
        %v1042 = vunpack.c.l.s4 1983009808
        %v1043 = vunpack.c.0.s8 %v1042
        %v1044 = vlaneseq
        %v1045 = vshrl.u32 %v1044, 7
        %v1046 = vsub.s32 %v1043, %v1045
        %v1047 = vrot.slane %v1040, %v1046
        %v1048 = vcombine.low %v952, %v959
        %v1050 = vunpack.c.l.s4 1983009808
        %v1051 = vunpack.c.0.s8 %v1050
        %v1052 = vlaneseq
        %v1053 = vshrl.u32 %v1052, 7
        %v1054 = vsub.s32 %v1051, %v1053
        %v1055 = vrot.slane %v1048, %v1054
        %v1056 = vcombine.low %v962, %v963
        %v1058 = vunpack.c.l.s4 1983009808
        %v1059 = vunpack.c.0.s8 %v1058
        %v1060 = vlaneseq
        %v1061 = vshrl.u32 %v1060, 7
        %v1062 = vsub.s32 %v1059, %v1061
        %v1063 = vrot.slane %v1056, %v1062
        %v1064 = vcombine.low %v1039, %v1047
        %v1065 = vcombine.high %v1039, %v1047
        %v1067 = vunpack.c.l.s4 1934713408
        %v1068 = vunpack.c.0.s8 %v1067
        %v1069 = vlaneseq
        %v1070 = vshrl.u32 %v1069, 7
        %v1071 = vsub.s32 %v1068, %v1070
        %v1072 = vrot.slane %v1064, %v1071
        %v1074 = vunpack.c.l.s4 1934713408
        %v1075 = vunpack.c.0.s8 %v1074
        %v1076 = vlaneseq
        %v1077 = vshrl.u32 %v1076, 7
        %v1078 = vsub.s32 %v1075, %v1077
        %v1079 = vrot.slane %v1065, %v1078
        %v1080 = vcombine.low %v1055, %v1063
        %v1081 = vcombine.high %v1055, %v1063
        %v1083 = vunpack.c.l.s4 1934713408
        %v1084 = vunpack.c.0.s8 %v1083
        %v1085 = vlaneseq
        %v1086 = vshrl.u32 %v1085, 7
        %v1087 = vsub.s32 %v1084, %v1086
        %v1088 = vrot.slane %v1080, %v1087
        %v1090 = vunpack.c.l.s4 1934713408
        %v1091 = vunpack.c.0.s8 %v1090
        %v1092 = vlaneseq
        %v1093 = vshrl.u32 %v1092, 7
        %v1094 = vsub.s32 %v1091, %v1093
        %v1095 = vrot.slane %v1081, %v1094
        %v1096 = vcombine.low %v1072, %v1088
        %v1097 = vcombine.high %v1072, %v1088
        %v1098 = vcombine.low %v1079, %v1095
        %v1099 = vcombine.high %v1079, %v1095
        %v1100 = vcombine.low %v1004, %v1011
        %v1102 = vunpack.c.l.s4 1983009808
        %v1103 = vunpack.c.0.s8 %v1102
        %v1104 = vlaneseq
        %v1105 = vshrl.u32 %v1104, 7
        %v1106 = vsub.s32 %v1103, %v1105
        %v1107 = vrot.slane %v1100, %v1106
        %v1108 = vcombine.low %v1028, %v1029
        %v1110 = vunpack.c.l.s4 1983009808
        %v1111 = vunpack.c.0.s8 %v1110
        %v1112 = vlaneseq
        %v1113 = vshrl.u32 %v1112, 7
        %v1114 = vsub.s32 %v1111, %v1113
        %v1115 = vrot.slane %v1108, %v1114
        %v1116 = vcombine.low %v1020, %v1027
        %v1118 = vunpack.c.l.s4 1983009808
        %v1119 = vunpack.c.0.s8 %v1118
        %v1120 = vlaneseq
        %v1121 = vshrl.u32 %v1120, 7
        %v1122 = vsub.s32 %v1119, %v1121
        %v1123 = vrot.slane %v1116, %v1122
        %v1124 = vcombine.low %v1030, %v1031
        %v1126 = vunpack.c.l.s4 1983009808
        %v1127 = vunpack.c.0.s8 %v1126
        %v1128 = vlaneseq
        %v1129 = vshrl.u32 %v1128, 7
        %v1130 = vsub.s32 %v1127, %v1129
        %v1131 = vrot.slane %v1124, %v1130
        %v1132 = vcombine.low %v1107, %v1115
        %v1133 = vcombine.high %v1107, %v1115
        %v1135 = vunpack.c.l.s4 1934713408
        %v1136 = vunpack.c.0.s8 %v1135
        %v1137 = vlaneseq
        %v1138 = vshrl.u32 %v1137, 7
        %v1139 = vsub.s32 %v1136, %v1138
        %v1140 = vrot.slane %v1132, %v1139
        %v1142 = vunpack.c.l.s4 1934713408
        %v1143 = vunpack.c.0.s8 %v1142
        %v1144 = vlaneseq
        %v1145 = vshrl.u32 %v1144, 7
        %v1146 = vsub.s32 %v1143, %v1145
        %v1147 = vrot.slane %v1133, %v1146
        %v1148 = vcombine.low %v1123, %v1131
        %v1149 = vcombine.high %v1123, %v1131
        %v1151 = vunpack.c.l.s4 1934713408
        %v1152 = vunpack.c.0.s8 %v1151
        %v1153 = vlaneseq
        %v1154 = vshrl.u32 %v1153, 7
        %v1155 = vsub.s32 %v1152, %v1154
        %v1156 = vrot.slane %v1148, %v1155
        %v1158 = vunpack.c.l.s4 1934713408
        %v1159 = vunpack.c.0.s8 %v1158
        %v1160 = vlaneseq
        %v1161 = vshrl.u32 %v1160, 7
        %v1162 = vsub.s32 %v1159, %v1161
        %v1163 = vrot.slane %v1149, %v1162
        %v1164 = vcombine.low %v1140, %v1156
        %v1165 = vcombine.high %v1140, %v1156
        %v1166 = vcombine.low %v1147, %v1163
        %v1167 = vcombine.high %v1147, %v1163
        %v1168 = vpack.c.bf16 %v1096, %v1096
        %v1169 = vpack.c.bf16 %v1097, %v1097
        %v1170 = vpack.c.bf16 %v1098, %v1098
        %v1171 = vpack.c.bf16 %v1099, %v1099
        %v1172 = vpack.c.bf16 %v1164, %v1164
        %v1173 = vpack.c.bf16 %v1165, %v1165
        %v1174 = vpack.c.bf16 %v1166, %v1166
        %v1175 = vpack.c.bf16 %v1167, %v1167
        %1178 = vrot.lane.b32.xlu0 %v570, 120
        %v1179 = vpop.permute.xlu0 %1178
        %1180 = vrot.lane.b32.xlu0 %v573, 120
        %v1181 = vpop.permute.xlu0 %1180
        %1184 = vrot.lane.b32.xlu0 %v570, 112
        %v1185 = vpop.permute.xlu0 %1184
        %1186 = vrot.lane.b32.xlu0 %v573, 112
        %v1187 = vpop.permute.xlu0 %1186
        %1190 = vrot.lane.b32.xlu0 %v570, 104
        %v1191 = vpop.permute.xlu0 %1190
        %1192 = vrot.lane.b32.xlu0 %v573, 104
        %v1193 = vpop.permute.xlu0 %1192
        %v1196 = vcombine.low %v570, %v1185
        %v1197 = vcombine.high %v570, %v1185
        %v1199 = vunpack.c.l.s4 1983009808
        %v1200 = vunpack.c.0.s8 %v1199
        %v1201 = vlaneseq
        %v1202 = vshrl.u32 %v1201, 7
        %v1203 = vsub.s32 %v1200, %v1202
        %v1204 = vrot.slane %v1196, %v1203
        %v1206 = vunpack.c.l.s4 1983009808
        %v1207 = vunpack.c.0.s8 %v1206
        %v1208 = vlaneseq
        %v1209 = vshrl.u32 %v1208, 7
        %v1210 = vsub.s32 %v1207, %v1209
        %v1211 = vrot.slane %v1197, %v1210
        %v1212 = vcombine.low %v1179, %v1191
        %v1213 = vcombine.high %v1179, %v1191
        %v1215 = vunpack.c.l.s4 1983009808
        %v1216 = vunpack.c.0.s8 %v1215
        %v1217 = vlaneseq
        %v1218 = vshrl.u32 %v1217, 7
        %v1219 = vsub.s32 %v1216, %v1218
        %v1220 = vrot.slane %v1212, %v1219
        %v1222 = vunpack.c.l.s4 1983009808
        %v1223 = vunpack.c.0.s8 %v1222
        %v1224 = vlaneseq
        %v1225 = vshrl.u32 %v1224, 7
        %v1226 = vsub.s32 %v1223, %v1225
        %v1227 = vrot.slane %v1213, %v1226
        %v1228 = vcombine.low %v1204, %v1220
        %v1229 = vcombine.high %v1204, %v1220
        %v1231 = vunpack.c.l.s4 1934713408
        %v1232 = vunpack.c.0.s8 %v1231
        %v1233 = vlaneseq
        %v1234 = vshrl.u32 %v1233, 7
        %v1235 = vsub.s32 %v1232, %v1234
        %v1236 = vrot.slane %v1228, %v1235
        %v1238 = vunpack.c.l.s4 1934713408
        %v1239 = vunpack.c.0.s8 %v1238
        %v1240 = vlaneseq
        %v1241 = vshrl.u32 %v1240, 7
        %v1242 = vsub.s32 %v1239, %v1241
        %v1243 = vrot.slane %v1229, %v1242
        %v1244 = vcombine.low %v1211, %v1227
        %v1245 = vcombine.high %v1211, %v1227
        %v1247 = vunpack.c.l.s4 1934713408
        %v1248 = vunpack.c.0.s8 %v1247
        %v1249 = vlaneseq
        %v1250 = vshrl.u32 %v1249, 7
        %v1251 = vsub.s32 %v1248, %v1250
        %v1252 = vrot.slane %v1244, %v1251
        %v1254 = vunpack.c.l.s4 1934713408
        %v1255 = vunpack.c.0.s8 %v1254
        %v1256 = vlaneseq
        %v1257 = vshrl.u32 %v1256, 7
        %v1258 = vsub.s32 %v1255, %v1257
        %v1259 = vrot.slane %v1245, %v1258
        %v1260 = vcombine.high %v1236, 0.0
        %v1261 = vcombine.high %v1243, 0.0
        %v1262 = vcombine.high %v1252, 0.0
        %v1263 = vcombine.high %v1259, 0.0
        %v1264 = vcombine.low %v573, %v1187
        %v1265 = vcombine.high %v573, %v1187
        %v1267 = vunpack.c.l.s4 1983009808
        %v1268 = vunpack.c.0.s8 %v1267
        %v1269 = vlaneseq
        %v1270 = vshrl.u32 %v1269, 7
        %v1271 = vsub.s32 %v1268, %v1270
        %v1272 = vrot.slane %v1264, %v1271
        %v1274 = vunpack.c.l.s4 1983009808
        %v1275 = vunpack.c.0.s8 %v1274
        %v1276 = vlaneseq
        %v1277 = vshrl.u32 %v1276, 7
        %v1278 = vsub.s32 %v1275, %v1277
        %v1279 = vrot.slane %v1265, %v1278
        %v1280 = vcombine.low %v1181, %v1193
        %v1281 = vcombine.high %v1181, %v1193
        %v1283 = vunpack.c.l.s4 1983009808
        %v1284 = vunpack.c.0.s8 %v1283
        %v1285 = vlaneseq
        %v1286 = vshrl.u32 %v1285, 7
        %v1287 = vsub.s32 %v1284, %v1286
        %v1288 = vrot.slane %v1280, %v1287
        %v1290 = vunpack.c.l.s4 1983009808
        %v1291 = vunpack.c.0.s8 %v1290
        %v1292 = vlaneseq
        %v1293 = vshrl.u32 %v1292, 7
        %v1294 = vsub.s32 %v1291, %v1293
        %v1295 = vrot.slane %v1281, %v1294
        %v1296 = vcombine.low %v1272, %v1288
        %v1297 = vcombine.high %v1272, %v1288
        %v1299 = vunpack.c.l.s4 1934713408
        %v1300 = vunpack.c.0.s8 %v1299
        %v1301 = vlaneseq
        %v1302 = vshrl.u32 %v1301, 7
        %v1303 = vsub.s32 %v1300, %v1302
        %v1304 = vrot.slane %v1296, %v1303
        %v1306 = vunpack.c.l.s4 1934713408
        %v1307 = vunpack.c.0.s8 %v1306
        %v1308 = vlaneseq
        %v1309 = vshrl.u32 %v1308, 7
        %v1310 = vsub.s32 %v1307, %v1309
        %v1311 = vrot.slane %v1297, %v1310
        %v1312 = vcombine.low %v1279, %v1295
        %v1313 = vcombine.high %v1279, %v1295
        %v1315 = vunpack.c.l.s4 1934713408
        %v1316 = vunpack.c.0.s8 %v1315
        %v1317 = vlaneseq
        %v1318 = vshrl.u32 %v1317, 7
        %v1319 = vsub.s32 %v1316, %v1318
        %v1320 = vrot.slane %v1312, %v1319
        %v1322 = vunpack.c.l.s4 1934713408
        %v1323 = vunpack.c.0.s8 %v1322
        %v1324 = vlaneseq
        %v1325 = vshrl.u32 %v1324, 7
        %v1326 = vsub.s32 %v1323, %v1325
        %v1327 = vrot.slane %v1313, %v1326
        %v1328 = vcombine.high %v1304, 0.0
        %v1329 = vcombine.high %v1311, 0.0
        %v1330 = vcombine.high %v1320, 0.0
        %v1331 = vcombine.high %v1327, 0.0
        %v1332 = vcombine.low %v1236, %v1243
        %v1334 = vunpack.c.l.s4 1983009808
        %v1335 = vunpack.c.0.s8 %v1334
        %v1336 = vlaneseq
        %v1337 = vshrl.u32 %v1336, 7
        %v1338 = vsub.s32 %v1335, %v1337
        %v1339 = vrot.slane %v1332, %v1338
        %v1340 = vcombine.low %v1260, %v1261
        %v1342 = vunpack.c.l.s4 1983009808
        %v1343 = vunpack.c.0.s8 %v1342
        %v1344 = vlaneseq
        %v1345 = vshrl.u32 %v1344, 7
        %v1346 = vsub.s32 %v1343, %v1345
        %v1347 = vrot.slane %v1340, %v1346
        %v1348 = vcombine.low %v1252, %v1259
        %v1350 = vunpack.c.l.s4 1983009808
        %v1351 = vunpack.c.0.s8 %v1350
        %v1352 = vlaneseq
        %v1353 = vshrl.u32 %v1352, 7
        %v1354 = vsub.s32 %v1351, %v1353
        %v1355 = vrot.slane %v1348, %v1354
        %v1356 = vcombine.low %v1262, %v1263
        %v1358 = vunpack.c.l.s4 1983009808
        %v1359 = vunpack.c.0.s8 %v1358
        %v1360 = vlaneseq
        %v1361 = vshrl.u32 %v1360, 7
        %v1362 = vsub.s32 %v1359, %v1361
        %v1363 = vrot.slane %v1356, %v1362
        %v1364 = vcombine.low %v1339, %v1347
        %v1365 = vcombine.high %v1339, %v1347
        %v1367 = vunpack.c.l.s4 1934713408
        %v1368 = vunpack.c.0.s8 %v1367
        %v1369 = vlaneseq
        %v1370 = vshrl.u32 %v1369, 7
        %v1371 = vsub.s32 %v1368, %v1370
        %v1372 = vrot.slane %v1364, %v1371
        %v1374 = vunpack.c.l.s4 1934713408
        %v1375 = vunpack.c.0.s8 %v1374
        %v1376 = vlaneseq
        %v1377 = vshrl.u32 %v1376, 7
        %v1378 = vsub.s32 %v1375, %v1377
        %v1379 = vrot.slane %v1365, %v1378
        %v1380 = vcombine.low %v1355, %v1363
        %v1381 = vcombine.high %v1355, %v1363
        %v1383 = vunpack.c.l.s4 1934713408
        %v1384 = vunpack.c.0.s8 %v1383
        %v1385 = vlaneseq
        %v1386 = vshrl.u32 %v1385, 7
        %v1387 = vsub.s32 %v1384, %v1386
        %v1388 = vrot.slane %v1380, %v1387
        %v1390 = vunpack.c.l.s4 1934713408
        %v1391 = vunpack.c.0.s8 %v1390
        %v1392 = vlaneseq
        %v1393 = vshrl.u32 %v1392, 7
        %v1394 = vsub.s32 %v1391, %v1393
        %v1395 = vrot.slane %v1381, %v1394
        %v1396 = vcombine.low %v1372, %v1388
        %v1397 = vcombine.high %v1372, %v1388
        %v1398 = vcombine.low %v1379, %v1395
        %v1399 = vcombine.high %v1379, %v1395
        %v1400 = vcombine.low %v1304, %v1311
        %v1402 = vunpack.c.l.s4 1983009808
        %v1403 = vunpack.c.0.s8 %v1402
        %v1404 = vlaneseq
        %v1405 = vshrl.u32 %v1404, 7
        %v1406 = vsub.s32 %v1403, %v1405
        %v1407 = vrot.slane %v1400, %v1406
        %v1408 = vcombine.low %v1328, %v1329
        %v1410 = vunpack.c.l.s4 1983009808
        %v1411 = vunpack.c.0.s8 %v1410
        %v1412 = vlaneseq
        %v1413 = vshrl.u32 %v1412, 7
        %v1414 = vsub.s32 %v1411, %v1413
        %v1415 = vrot.slane %v1408, %v1414
        %v1416 = vcombine.low %v1320, %v1327
        %v1418 = vunpack.c.l.s4 1983009808
        %v1419 = vunpack.c.0.s8 %v1418
        %v1420 = vlaneseq
        %v1421 = vshrl.u32 %v1420, 7
        %v1422 = vsub.s32 %v1419, %v1421
        %v1423 = vrot.slane %v1416, %v1422
        %v1424 = vcombine.low %v1330, %v1331
        %v1426 = vunpack.c.l.s4 1983009808
        %v1427 = vunpack.c.0.s8 %v1426
        %v1428 = vlaneseq
        %v1429 = vshrl.u32 %v1428, 7
        %v1430 = vsub.s32 %v1427, %v1429
        %v1431 = vrot.slane %v1424, %v1430
        %v1432 = vcombine.low %v1407, %v1415
        %v1433 = vcombine.high %v1407, %v1415
        %v1435 = vunpack.c.l.s4 1934713408
        %v1436 = vunpack.c.0.s8 %v1435
        %v1437 = vlaneseq
        %v1438 = vshrl.u32 %v1437, 7
        %v1439 = vsub.s32 %v1436, %v1438
        %v1440 = vrot.slane %v1432, %v1439
        %v1442 = vunpack.c.l.s4 1934713408
        %v1443 = vunpack.c.0.s8 %v1442
        %v1444 = vlaneseq
        %v1445 = vshrl.u32 %v1444, 7
        %v1446 = vsub.s32 %v1443, %v1445
        %v1447 = vrot.slane %v1433, %v1446
        %v1448 = vcombine.low %v1423, %v1431
        %v1449 = vcombine.high %v1423, %v1431
        %v1451 = vunpack.c.l.s4 1934713408
        %v1452 = vunpack.c.0.s8 %v1451
        %v1453 = vlaneseq
        %v1454 = vshrl.u32 %v1453, 7
        %v1455 = vsub.s32 %v1452, %v1454
        %v1456 = vrot.slane %v1448, %v1455
        %v1458 = vunpack.c.l.s4 1934713408
        %v1459 = vunpack.c.0.s8 %v1458
        %v1460 = vlaneseq
        %v1461 = vshrl.u32 %v1460, 7
        %v1462 = vsub.s32 %v1459, %v1461
        %v1463 = vrot.slane %v1449, %v1462
        %v1464 = vcombine.low %v1440, %v1456
        %v1465 = vcombine.high %v1440, %v1456
        %v1466 = vcombine.low %v1447, %v1463
        %v1467 = vcombine.high %v1447, %v1463
        %v1468 = vpack.c.bf16 %v1396, %v1396
        %v1469 = vpack.c.bf16 %v1397, %v1397
        %v1470 = vpack.c.bf16 %v1398, %v1398
        %v1471 = vpack.c.bf16 %v1399, %v1399
        %v1472 = vpack.c.bf16 %v1464, %v1464
        %v1473 = vpack.c.bf16 %v1465, %v1465
        %v1474 = vpack.c.bf16 %v1466, %v1466
        %v1475 = vpack.c.bf16 %v1467, %v1467
        %vm1476 = vcmask 64512
        %v1478 = vsel %vm1476, %v868, 0
        %v1481 = vsel %vm1476, %v1168, 0
        %1483 = vmatprep.subr.bf16.mxu0 0
        %1484 = vmatpush1.bf16.xpose.msra.mxu0 %v1481
        %1485 = vmatprep.subr.bf16.mxu0 0
        %1486 = vmatpush1.bf16.xpose.msra.mxu0 0
        %1487 = vmatprep.subr.bf16.mxu0 0
        %1488 = vmatpush1.bf16.xpose.msra.mxu0 0
        %1489 = vmatprep.subr.bf16.mxu0 0
        %1490 = vmatpush1.bf16.xpose.msra.mxu0 0
        %1491 = vmatprep.subr.bf16.mxu0 0
        %1492 = vmatpush1.bf16.xpose.msra.mxu0 0
        %1493 = vmatprep.subr.bf16.mxu0 0
        %1494 = vmatpush1.bf16.xpose.msra.mxu0 0
        %1495 = vmatprep.subr.bf16.mxu0 0
        %1496 = vmatpush1.bf16.xpose.msra.mxu0 0
        %1497 = vmatprep.subr.bf16.mxu0 0
        %1498 = vmatpush1.bf16.xpose.msra.mxu0 0
        %1499 = vmatprep.subr.bf16.mxu0 0
        %1500 = vmatpush1.bf16.xpose.msra.mxu0 0
        %1501 = vmatprep.subr.bf16.mxu0 0
        %1502 = vmatpush1.bf16.xpose.msra.mxu0 0
        %1503 = vmatprep.subr.bf16.mxu0 0
        %1504 = vmatpush1.bf16.xpose.msra.mxu0 0
        %1505 = vmatprep.subr.bf16.mxu0 0
        %1506 = vmatpush1.bf16.xpose.msra.mxu0 0
        %1507 = vmatprep.subr.bf16.mxu0 0
        %1508 = vmatpush1.bf16.xpose.msra.mxu0 0
        %1509 = vmatprep.subr.bf16.mxu0 0
        %1510 = vmatpush1.bf16.xpose.msra.mxu0 0
        %1511 = vmatprep.subr.bf16.mxu0 0
        %1512 = vmatpush1.bf16.xpose.msra.mxu0 0
        %1513 = vmatprep.subr.bf16.mxu0 0
        %1514 = vmatpush1.bf16.xpose.msra.mxu0 0
        %1515 = vmatprep.mubr.bf16.mxu0 0
        %1516 = vmatmul.mubr.bf16.gmra.mrb[0].mxu0 %v1478
        %v1517 = vpop.f32.mrb[0].mxu0
        %v1518 = vadd.f32 0.0, %v1517
        %v1519 = vpop.f32.mrb[0].mxu0
        %v1520 = vpop.f32.mrb[0].mxu0
        %v1521 = vpop.f32.mrb[0].mxu0
        %1522 = vdwg.mxu0
        %v1524 = vsel %vm1476, %v869, 0
        %v1527 = vsel %vm1476, %v1169, 0
        %1529 = vmatprep.subr.bf16.mxu0 0
        %1530 = vmatpush1.bf16.xpose.msra.mxu0 %v1527
        %1531 = vmatprep.subr.bf16.mxu0 0
        %1532 = vmatpush1.bf16.xpose.msra.mxu0 0
        %1533 = vmatprep.subr.bf16.mxu0 0
        %1534 = vmatpush1.bf16.xpose.msra.mxu0 0
        %1535 = vmatprep.subr.bf16.mxu0 0
        %1536 = vmatpush1.bf16.xpose.msra.mxu0 0
        %1537 = vmatprep.subr.bf16.mxu0 0
        %1538 = vmatpush1.bf16.xpose.msra.mxu0 0
        %1539 = vmatprep.subr.bf16.mxu0 0
        %1540 = vmatpush1.bf16.xpose.msra.mxu0 0
        %1541 = vmatprep.subr.bf16.mxu0 0
        %1542 = vmatpush1.bf16.xpose.msra.mxu0 0
        %1543 = vmatprep.subr.bf16.mxu0 0
        %1544 = vmatpush1.bf16.xpose.msra.mxu0 0
        %1545 = vmatprep.subr.bf16.mxu0 0
        %1546 = vmatpush1.bf16.xpose.msra.mxu0 0
        %1547 = vmatprep.subr.bf16.mxu0 0
        %1548 = vmatpush1.bf16.xpose.msra.mxu0 0
        %1549 = vmatprep.subr.bf16.mxu0 0
        %1550 = vmatpush1.bf16.xpose.msra.mxu0 0
        %1551 = vmatprep.subr.bf16.mxu0 0
        %1552 = vmatpush1.bf16.xpose.msra.mxu0 0
        %1553 = vmatprep.subr.bf16.mxu0 0
        %1554 = vmatpush1.bf16.xpose.msra.mxu0 0
        %1555 = vmatprep.subr.bf16.mxu0 0
        %1556 = vmatpush1.bf16.xpose.msra.mxu0 0
        %1557 = vmatprep.subr.bf16.mxu0 0
        %1558 = vmatpush1.bf16.xpose.msra.mxu0 0
        %1559 = vmatprep.subr.bf16.mxu0 0
        %1560 = vmatpush1.bf16.xpose.msra.mxu0 0
        %1561 = vmatprep.mubr.bf16.mxu0 0
        %1562 = vmatmul.mubr.bf16.gmra.mrb[0].mxu0 %v1524
        %v1563 = vpop.f32.mrb[0].mxu0
        %v1564 = vadd.f32 0.0, %v1563
        %v1565 = vpop.f32.mrb[0].mxu0
        %v1566 = vpop.f32.mrb[0].mxu0
        %v1567 = vpop.f32.mrb[0].mxu0
        %1568 = vdwg.mxu0
        %v1570 = vsel %vm1476, %v870, 0
        %v1573 = vsel %vm1476, %v1170, 0
        %1575 = vmatprep.subr.bf16.mxu0 0
        %1576 = vmatpush1.bf16.xpose.msra.mxu0 %v1573
        %1577 = vmatprep.subr.bf16.mxu0 0
        %1578 = vmatpush1.bf16.xpose.msra.mxu0 0
        %1579 = vmatprep.subr.bf16.mxu0 0
        %1580 = vmatpush1.bf16.xpose.msra.mxu0 0
        %1581 = vmatprep.subr.bf16.mxu0 0
        %1582 = vmatpush1.bf16.xpose.msra.mxu0 0
        %1583 = vmatprep.subr.bf16.mxu0 0
        %1584 = vmatpush1.bf16.xpose.msra.mxu0 0
        %1585 = vmatprep.subr.bf16.mxu0 0
        %1586 = vmatpush1.bf16.xpose.msra.mxu0 0
        %1587 = vmatprep.subr.bf16.mxu0 0
        %1588 = vmatpush1.bf16.xpose.msra.mxu0 0
        %1589 = vmatprep.subr.bf16.mxu0 0
        %1590 = vmatpush1.bf16.xpose.msra.mxu0 0
        %1591 = vmatprep.subr.bf16.mxu0 0
        %1592 = vmatpush1.bf16.xpose.msra.mxu0 0
        %1593 = vmatprep.subr.bf16.mxu0 0
        %1594 = vmatpush1.bf16.xpose.msra.mxu0 0
        %1595 = vmatprep.subr.bf16.mxu0 0
        %1596 = vmatpush1.bf16.xpose.msra.mxu0 0
        %1597 = vmatprep.subr.bf16.mxu0 0
        %1598 = vmatpush1.bf16.xpose.msra.mxu0 0
        %1599 = vmatprep.subr.bf16.mxu0 0
        %1600 = vmatpush1.bf16.xpose.msra.mxu0 0
        %1601 = vmatprep.subr.bf16.mxu0 0
        %1602 = vmatpush1.bf16.xpose.msra.mxu0 0
        %1603 = vmatprep.subr.bf16.mxu0 0
        %1604 = vmatpush1.bf16.xpose.msra.mxu0 0
        %1605 = vmatprep.subr.bf16.mxu0 0
        %1606 = vmatpush1.bf16.xpose.msra.mxu0 0
        %1607 = vmatprep.mubr.bf16.mxu0 0
        %1608 = vmatmul.mubr.bf16.gmra.mrb[0].mxu0 %v1570
        %v1609 = vpop.f32.mrb[0].mxu0
        %v1610 = vadd.f32 0.0, %v1609
        %v1611 = vpop.f32.mrb[0].mxu0
        %v1612 = vpop.f32.mrb[0].mxu0
        %v1613 = vpop.f32.mrb[0].mxu0
        %1614 = vdwg.mxu0
        %v1616 = vsel %vm1476, %v871, 0
        %v1619 = vsel %vm1476, %v1171, 0
        %1621 = vmatprep.subr.bf16.mxu0 0
        %1622 = vmatpush1.bf16.xpose.msra.mxu0 %v1619
        %1623 = vmatprep.subr.bf16.mxu0 0
        %1624 = vmatpush1.bf16.xpose.msra.mxu0 0
        %1625 = vmatprep.subr.bf16.mxu0 0
        %1626 = vmatpush1.bf16.xpose.msra.mxu0 0
        %1627 = vmatprep.subr.bf16.mxu0 0
        %1628 = vmatpush1.bf16.xpose.msra.mxu0 0
        %1629 = vmatprep.subr.bf16.mxu0 0
        %1630 = vmatpush1.bf16.xpose.msra.mxu0 0
        %1631 = vmatprep.subr.bf16.mxu0 0
        %1632 = vmatpush1.bf16.xpose.msra.mxu0 0
        %1633 = vmatprep.subr.bf16.mxu0 0
        %1634 = vmatpush1.bf16.xpose.msra.mxu0 0
        %1635 = vmatprep.subr.bf16.mxu0 0
        %1636 = vmatpush1.bf16.xpose.msra.mxu0 0
        %1637 = vmatprep.subr.bf16.mxu0 0
        %1638 = vmatpush1.bf16.xpose.msra.mxu0 0
        %1639 = vmatprep.subr.bf16.mxu0 0
        %1640 = vmatpush1.bf16.xpose.msra.mxu0 0
        %1641 = vmatprep.subr.bf16.mxu0 0
        %1642 = vmatpush1.bf16.xpose.msra.mxu0 0
        %1643 = vmatprep.subr.bf16.mxu0 0
        %1644 = vmatpush1.bf16.xpose.msra.mxu0 0
        %1645 = vmatprep.subr.bf16.mxu0 0
        %1646 = vmatpush1.bf16.xpose.msra.mxu0 0
        %1647 = vmatprep.subr.bf16.mxu0 0
        %1648 = vmatpush1.bf16.xpose.msra.mxu0 0
        %1649 = vmatprep.subr.bf16.mxu0 0
        %1650 = vmatpush1.bf16.xpose.msra.mxu0 0
        %1651 = vmatprep.subr.bf16.mxu0 0
        %1652 = vmatpush1.bf16.xpose.msra.mxu0 0
        %1653 = vmatprep.mubr.bf16.mxu0 0
        %1654 = vmatmul.mubr.bf16.gmra.mrb[0].mxu0 %v1616
        %v1655 = vpop.f32.mrb[0].mxu0
        %v1656 = vadd.f32 0.0, %v1655
        %v1657 = vpop.f32.mrb[0].mxu0
        %v1658 = vpop.f32.mrb[0].mxu0
        %v1659 = vpop.f32.mrb[0].mxu0
        %1660 = vdwg.mxu0
        %v1662 = vsel %vm1476, %v872, 0
        %v1665 = vsel %vm1476, %v1172, 0
        %1667 = vmatprep.subr.bf16.mxu0 0
        %1668 = vmatpush1.bf16.xpose.msra.mxu0 %v1665
        %1669 = vmatprep.subr.bf16.mxu0 0
        %1670 = vmatpush1.bf16.xpose.msra.mxu0 0
        %1671 = vmatprep.subr.bf16.mxu0 0
        %1672 = vmatpush1.bf16.xpose.msra.mxu0 0
        %1673 = vmatprep.subr.bf16.mxu0 0
        %1674 = vmatpush1.bf16.xpose.msra.mxu0 0
        %1675 = vmatprep.subr.bf16.mxu0 0
        %1676 = vmatpush1.bf16.xpose.msra.mxu0 0
        %1677 = vmatprep.subr.bf16.mxu0 0
        %1678 = vmatpush1.bf16.xpose.msra.mxu0 0
        %1679 = vmatprep.subr.bf16.mxu0 0
        %1680 = vmatpush1.bf16.xpose.msra.mxu0 0
        %1681 = vmatprep.subr.bf16.mxu0 0
        %1682 = vmatpush1.bf16.xpose.msra.mxu0 0
        %1683 = vmatprep.subr.bf16.mxu0 0
        %1684 = vmatpush1.bf16.xpose.msra.mxu0 0
        %1685 = vmatprep.subr.bf16.mxu0 0
        %1686 = vmatpush1.bf16.xpose.msra.mxu0 0
        %1687 = vmatprep.subr.bf16.mxu0 0
        %1688 = vmatpush1.bf16.xpose.msra.mxu0 0
        %1689 = vmatprep.subr.bf16.mxu0 0
        %1690 = vmatpush1.bf16.xpose.msra.mxu0 0
        %1691 = vmatprep.subr.bf16.mxu0 0
        %1692 = vmatpush1.bf16.xpose.msra.mxu0 0
        %1693 = vmatprep.subr.bf16.mxu0 0
        %1694 = vmatpush1.bf16.xpose.msra.mxu0 0
        %1695 = vmatprep.subr.bf16.mxu0 0
        %1696 = vmatpush1.bf16.xpose.msra.mxu0 0
        %1697 = vmatprep.subr.bf16.mxu0 0
        %1698 = vmatpush1.bf16.xpose.msra.mxu0 0
        %1699 = vmatprep.mubr.bf16.mxu0 0
        %1700 = vmatmul.mubr.bf16.gmra.mrb[0].mxu0 %v1662
        %v1701 = vpop.f32.mrb[0].mxu0
        %v1702 = vadd.f32 0.0, %v1701
        %v1703 = vpop.f32.mrb[0].mxu0
        %v1704 = vpop.f32.mrb[0].mxu0
        %v1705 = vpop.f32.mrb[0].mxu0
        %1706 = vdwg.mxu0
        %v1708 = vsel %vm1476, %v873, 0
        %v1711 = vsel %vm1476, %v1173, 0
        %1713 = vmatprep.subr.bf16.mxu0 0
        %1714 = vmatpush1.bf16.xpose.msra.mxu0 %v1711
        %1715 = vmatprep.subr.bf16.mxu0 0
        %1716 = vmatpush1.bf16.xpose.msra.mxu0 0
        %1717 = vmatprep.subr.bf16.mxu0 0
        %1718 = vmatpush1.bf16.xpose.msra.mxu0 0
        %1719 = vmatprep.subr.bf16.mxu0 0
        %1720 = vmatpush1.bf16.xpose.msra.mxu0 0
        %1721 = vmatprep.subr.bf16.mxu0 0
        %1722 = vmatpush1.bf16.xpose.msra.mxu0 0
        %1723 = vmatprep.subr.bf16.mxu0 0
        %1724 = vmatpush1.bf16.xpose.msra.mxu0 0
        %1725 = vmatprep.subr.bf16.mxu0 0
        %1726 = vmatpush1.bf16.xpose.msra.mxu0 0
        %1727 = vmatprep.subr.bf16.mxu0 0
        %1728 = vmatpush1.bf16.xpose.msra.mxu0 0
        %1729 = vmatprep.subr.bf16.mxu0 0
        %1730 = vmatpush1.bf16.xpose.msra.mxu0 0
        %1731 = vmatprep.subr.bf16.mxu0 0
        %1732 = vmatpush1.bf16.xpose.msra.mxu0 0
        %1733 = vmatprep.subr.bf16.mxu0 0
        %1734 = vmatpush1.bf16.xpose.msra.mxu0 0
        %1735 = vmatprep.subr.bf16.mxu0 0
        %1736 = vmatpush1.bf16.xpose.msra.mxu0 0
        %1737 = vmatprep.subr.bf16.mxu0 0
        %1738 = vmatpush1.bf16.xpose.msra.mxu0 0
        %1739 = vmatprep.subr.bf16.mxu0 0
        %1740 = vmatpush1.bf16.xpose.msra.mxu0 0
        %1741 = vmatprep.subr.bf16.mxu0 0
        %1742 = vmatpush1.bf16.xpose.msra.mxu0 0
        %1743 = vmatprep.subr.bf16.mxu0 0
        %1744 = vmatpush1.bf16.xpose.msra.mxu0 0
        %1745 = vmatprep.mubr.bf16.mxu0 0
        %1746 = vmatmul.mubr.bf16.gmra.mrb[0].mxu0 %v1708
        %v1747 = vpop.f32.mrb[0].mxu0
        %v1748 = vadd.f32 0.0, %v1747
        %v1749 = vpop.f32.mrb[0].mxu0
        %v1750 = vpop.f32.mrb[0].mxu0
        %v1751 = vpop.f32.mrb[0].mxu0
        %1752 = vdwg.mxu0
        %v1754 = vsel %vm1476, %v874, 0
        %v1757 = vsel %vm1476, %v1174, 0
        %1759 = vmatprep.subr.bf16.mxu0 0
        %1760 = vmatpush1.bf16.xpose.msra.mxu0 %v1757
        %1761 = vmatprep.subr.bf16.mxu0 0
        %1762 = vmatpush1.bf16.xpose.msra.mxu0 0
        %1763 = vmatprep.subr.bf16.mxu0 0
        %1764 = vmatpush1.bf16.xpose.msra.mxu0 0
        %1765 = vmatprep.subr.bf16.mxu0 0
        %1766 = vmatpush1.bf16.xpose.msra.mxu0 0
        %1767 = vmatprep.subr.bf16.mxu0 0
        %1768 = vmatpush1.bf16.xpose.msra.mxu0 0
        %1769 = vmatprep.subr.bf16.mxu0 0
        %1770 = vmatpush1.bf16.xpose.msra.mxu0 0
        %1771 = vmatprep.subr.bf16.mxu0 0
        %1772 = vmatpush1.bf16.xpose.msra.mxu0 0
        %1773 = vmatprep.subr.bf16.mxu0 0
        %1774 = vmatpush1.bf16.xpose.msra.mxu0 0
        %1775 = vmatprep.subr.bf16.mxu0 0
        %1776 = vmatpush1.bf16.xpose.msra.mxu0 0
        %1777 = vmatprep.subr.bf16.mxu0 0
        %1778 = vmatpush1.bf16.xpose.msra.mxu0 0
        %1779 = vmatprep.subr.bf16.mxu0 0
        %1780 = vmatpush1.bf16.xpose.msra.mxu0 0
        %1781 = vmatprep.subr.bf16.mxu0 0
        %1782 = vmatpush1.bf16.xpose.msra.mxu0 0
        %1783 = vmatprep.subr.bf16.mxu0 0
        %1784 = vmatpush1.bf16.xpose.msra.mxu0 0
        %1785 = vmatprep.subr.bf16.mxu0 0
        %1786 = vmatpush1.bf16.xpose.msra.mxu0 0
        %1787 = vmatprep.subr.bf16.mxu0 0
        %1788 = vmatpush1.bf16.xpose.msra.mxu0 0
        %1789 = vmatprep.subr.bf16.mxu0 0
        %1790 = vmatpush1.bf16.xpose.msra.mxu0 0
        %1791 = vmatprep.mubr.bf16.mxu0 0
        %1792 = vmatmul.mubr.bf16.gmra.mrb[0].mxu0 %v1754
        %v1793 = vpop.f32.mrb[0].mxu0
        %v1794 = vadd.f32 0.0, %v1793
        %v1795 = vpop.f32.mrb[0].mxu0
        %v1796 = vpop.f32.mrb[0].mxu0
        %v1797 = vpop.f32.mrb[0].mxu0
        %1798 = vdwg.mxu0
        %v1800 = vsel %vm1476, %v875, 0
        %v1803 = vsel %vm1476, %v1175, 0
        %1805 = vmatprep.subr.bf16.mxu0 0
        %1806 = vmatpush1.bf16.xpose.msra.mxu0 %v1803
        %1807 = vmatprep.subr.bf16.mxu0 0
        %1808 = vmatpush1.bf16.xpose.msra.mxu0 0
        %1809 = vmatprep.subr.bf16.mxu0 0
        %1810 = vmatpush1.bf16.xpose.msra.mxu0 0
        %1811 = vmatprep.subr.bf16.mxu0 0
        %1812 = vmatpush1.bf16.xpose.msra.mxu0 0
        %1813 = vmatprep.subr.bf16.mxu0 0
        %1814 = vmatpush1.bf16.xpose.msra.mxu0 0
        %1815 = vmatprep.subr.bf16.mxu0 0
        %1816 = vmatpush1.bf16.xpose.msra.mxu0 0
        %1817 = vmatprep.subr.bf16.mxu0 0
        %1818 = vmatpush1.bf16.xpose.msra.mxu0 0
        %1819 = vmatprep.subr.bf16.mxu0 0
        %1820 = vmatpush1.bf16.xpose.msra.mxu0 0
        %1821 = vmatprep.subr.bf16.mxu0 0
        %1822 = vmatpush1.bf16.xpose.msra.mxu0 0
        %1823 = vmatprep.subr.bf16.mxu0 0
        %1824 = vmatpush1.bf16.xpose.msra.mxu0 0
        %1825 = vmatprep.subr.bf16.mxu0 0
        %1826 = vmatpush1.bf16.xpose.msra.mxu0 0
        %1827 = vmatprep.subr.bf16.mxu0 0
        %1828 = vmatpush1.bf16.xpose.msra.mxu0 0
        %1829 = vmatprep.subr.bf16.mxu0 0
        %1830 = vmatpush1.bf16.xpose.msra.mxu0 0
        %1831 = vmatprep.subr.bf16.mxu0 0
        %1832 = vmatpush1.bf16.xpose.msra.mxu0 0
        %1833 = vmatprep.subr.bf16.mxu0 0
        %1834 = vmatpush1.bf16.xpose.msra.mxu0 0
        %1835 = vmatprep.subr.bf16.mxu0 0
        %1836 = vmatpush1.bf16.xpose.msra.mxu0 0
        %1837 = vmatprep.mubr.bf16.mxu0 0
        %1838 = vmatmul.mubr.bf16.gmra.mrb[0].mxu0 %v1800
        %v1839 = vpop.f32.mrb[0].mxu0
        %v1840 = vadd.f32 0.0, %v1839
        %v1841 = vpop.f32.mrb[0].mxu0
        %v1842 = vpop.f32.mrb[0].mxu0
        %v1843 = vpop.f32.mrb[0].mxu0
        %1844 = vdwg.mxu0
        %v1845 = vlaneseq
        %v1846 = vshrl.u32 %v1845, 7
        %v1847 = vlaneseq
        %v1848 = vand.u32 %v1847, 127
        %vm1849 = vcmp.gt.s32.totalorder %v1848, %v1846
        %v1850 = vsel %vm1849, 1, 0
        %vm1851 = vcmp.eq.s32.totalorder %v1850, 1
        %v1852 = vsel %vm1851, -inf, %v1518
        %v1853 = vsel %vm1851, -inf, %v1564
        %v1854 = vsel %vm1851, -inf, %v1610
        %v1855 = vsel %vm1851, -inf, %v1656
        %v1856 = vsel %vm1851, -inf, %v1702
        %v1857 = vsel %vm1851, -inf, %v1748
        %v1858 = vsel %vm1851, -inf, %v1794
        %v1859 = vsel %vm1851, -inf, %v1840
        %v1860 = vsel %vm1476, %v1852, -inf
        %1861 = vmax.xlane.f32.xlu0 %v1860
        %v1862 = vpop.xlane.xlu0 %1861
        %v1863 = vsel %vm1476, %v1853, -inf
        %1864 = vmax.xlane.f32.xlu0 %v1863
        %v1865 = vpop.xlane.xlu0 %1864
        %v1866 = vsel %vm1476, %v1854, -inf
        %1867 = vmax.xlane.f32.xlu0 %v1866
        %v1868 = vpop.xlane.xlu0 %1867
        %v1869 = vsel %vm1476, %v1855, -inf
        %1870 = vmax.xlane.f32.xlu0 %v1869
        %v1871 = vpop.xlane.xlu0 %1870
        %v1872 = vsel %vm1476, %v1856, -inf
        %1873 = vmax.xlane.f32.xlu0 %v1872
        %v1874 = vpop.xlane.xlu0 %1873
        %v1875 = vsel %vm1476, %v1857, -inf
        %1876 = vmax.xlane.f32.xlu0 %v1875
        %v1877 = vpop.xlane.xlu0 %1876
        %v1878 = vsel %vm1476, %v1858, -inf
        %1879 = vmax.xlane.f32.xlu0 %v1878
        %v1880 = vpop.xlane.xlu0 %1879
        %v1881 = vsel %vm1476, %v1859, -inf
        %1882 = vmax.xlane.f32.xlu0 %v1881
        %v1883 = vpop.xlane.xlu0 %1882
        %v1884 = vsub.f32 -inf, %v1862
        %v1885 = vsub.f32 -inf, %v1865
        %v1886 = vsub.f32 -inf, %v1868
        %v1887 = vsub.f32 -inf, %v1871
        %v1888 = vsub.f32 -inf, %v1874
        %v1889 = vsub.f32 -inf, %v1877
        %v1890 = vsub.f32 -inf, %v1880
        %v1891 = vsub.f32 -inf, %v1883
        %v1892 = vmul.f32 %v1884, 1.442695
        %v1893 = vpow.pop %v1892
        %v1894 = vmul.f32 %v1885, 1.442695
        %v1895 = vpow.pop %v1894
        %v1896 = vmul.f32 %v1886, 1.442695
        %v1897 = vpow.pop %v1896
        %v1898 = vmul.f32 %v1887, 1.442695
        %v1899 = vpow.pop %v1898
        %v1900 = vmul.f32 %v1888, 1.442695
        %v1901 = vpow.pop %v1900
        %v1902 = vmul.f32 %v1889, 1.442695
        %v1903 = vpow.pop %v1902
        %v1904 = vmul.f32 %v1890, 1.442695
        %v1905 = vpow.pop %v1904
        %v1906 = vmul.f32 %v1891, 1.442695
        %v1907 = vpow.pop %v1906
        %v1908 = vsub.f32 %v1852, %v1862
        %v1909 = vsub.f32 %v1853, %v1865
        %v1910 = vsub.f32 %v1854, %v1868
        %v1911 = vsub.f32 %v1855, %v1871
        %v1912 = vsub.f32 %v1856, %v1874
        %v1913 = vsub.f32 %v1857, %v1877
        %v1914 = vsub.f32 %v1858, %v1880
        %v1915 = vsub.f32 %v1859, %v1883
        %v1916 = vmul.f32 %v1908, 1.442695
        %v1917 = vpow.pop %v1916
        %v1918 = vmul.f32 %v1909, 1.442695
        %v1919 = vpow.pop %v1918
        %v1920 = vmul.f32 %v1910, 1.442695
        %v1921 = vpow.pop %v1920
        %v1922 = vmul.f32 %v1911, 1.442695
        %v1923 = vpow.pop %v1922
        %v1924 = vmul.f32 %v1912, 1.442695
        %v1925 = vpow.pop %v1924
        %v1926 = vmul.f32 %v1913, 1.442695
        %v1927 = vpow.pop %v1926
        %v1928 = vmul.f32 %v1914, 1.442695
        %v1929 = vpow.pop %v1928
        %v1930 = vmul.f32 %v1915, 1.442695
        %v1931 = vpow.pop %v1930
        %v1932 = vmul.f32 %v1893, 0.0
        %v1933 = vmul.f32 %v1895, 0.0
        %v1934 = vmul.f32 %v1897, 0.0
        %v1935 = vmul.f32 %v1899, 0.0
        %v1936 = vmul.f32 %v1901, 0.0
        %v1937 = vmul.f32 %v1903, 0.0
        %v1938 = vmul.f32 %v1905, 0.0
        %v1939 = vmul.f32 %v1907, 0.0
        %v1940 = vsel %vm1476, %v1917, 0.0
        %1941 = vadd.xlane.f32.xlu0 %v1940
        %v1942 = vpop.xlane.xlu0 %1941
        %v1943 = vsel %vm1476, %v1919, 0.0
        %1944 = vadd.xlane.f32.xlu0 %v1943
        %v1945 = vpop.xlane.xlu0 %1944
        %v1946 = vsel %vm1476, %v1921, 0.0
        %1947 = vadd.xlane.f32.xlu0 %v1946
        %v1948 = vpop.xlane.xlu0 %1947
        %v1949 = vsel %vm1476, %v1923, 0.0
        %1950 = vadd.xlane.f32.xlu0 %v1949
        %v1951 = vpop.xlane.xlu0 %1950
        %v1952 = vsel %vm1476, %v1925, 0.0
        %1953 = vadd.xlane.f32.xlu0 %v1952
        %v1954 = vpop.xlane.xlu0 %1953
        %v1955 = vsel %vm1476, %v1927, 0.0
        %1956 = vadd.xlane.f32.xlu0 %v1955
        %v1957 = vpop.xlane.xlu0 %1956
        %v1958 = vsel %vm1476, %v1929, 0.0
        %1959 = vadd.xlane.f32.xlu0 %v1958
        %v1960 = vpop.xlane.xlu0 %1959
        %v1961 = vsel %vm1476, %v1931, 0.0
        %1962 = vadd.xlane.f32.xlu0 %v1961
        %v1963 = vpop.xlane.xlu0 %1962
        %v1964 = vadd.f32 %v1932, %v1942
        %v1965 = vadd.f32 %v1933, %v1945
        %v1966 = vadd.f32 %v1934, %v1948
        %v1967 = vadd.f32 %v1935, %v1951
        %v1968 = vadd.f32 %v1936, %v1954
        %v1969 = vadd.f32 %v1937, %v1957
        %v1970 = vadd.f32 %v1938, %v1960
        %v1971 = vadd.f32 %v1939, %v1963
        %v1972 = vpack.c.bf16 %v1917, %v1917
        %v1973 = vpack.c.bf16 %v1919, %v1919
        %v1974 = vpack.c.bf16 %v1921, %v1921
        %v1975 = vpack.c.bf16 %v1923, %v1923
        %v1976 = vpack.c.bf16 %v1925, %v1925
        %v1977 = vpack.c.bf16 %v1927, %v1927
        %v1978 = vpack.c.bf16 %v1929, %v1929
        %v1979 = vpack.c.bf16 %v1931, %v1931
        %v1981 = vsel %vm1476, %v1972, 0
        %vm1983 = vcmask 1043456
        %v1985 = vsel %vm1983, %v1468, 0
        %1987 = vmatprep.subr.bf16.mxu0 0
        %1988 = vmatpush1.bf16.msra.mxu0 %v1985
        %1989 = vmatprep.subr.bf16.mxu0 0
        %1990 = vmatpush1.bf16.msra.mxu0 0
        %1991 = vmatprep.subr.bf16.mxu0 0
        %1992 = vmatpush1.bf16.msra.mxu0 0
        %1993 = vmatprep.subr.bf16.mxu0 0
        %1994 = vmatpush1.bf16.msra.mxu0 0
        %1995 = vmatprep.subr.bf16.mxu0 0
        %1996 = vmatpush1.bf16.msra.mxu0 0
        %1997 = vmatprep.subr.bf16.mxu0 0
        %1998 = vmatpush1.bf16.msra.mxu0 0
        %1999 = vmatprep.subr.bf16.mxu0 0
        %2000 = vmatpush1.bf16.msra.mxu0 0
        %2001 = vmatprep.subr.bf16.mxu0 0
        %2002 = vmatpush1.bf16.msra.mxu0 0
        %2003 = vmatprep.subr.bf16.mxu0 0
        %2004 = vmatpush1.bf16.msra.mxu0 0
        %2005 = vmatprep.subr.bf16.mxu0 0
        %2006 = vmatpush1.bf16.msra.mxu0 0
        %2007 = vmatprep.subr.bf16.mxu0 0
        %2008 = vmatpush1.bf16.msra.mxu0 0
        %2009 = vmatprep.subr.bf16.mxu0 0
        %2010 = vmatpush1.bf16.msra.mxu0 0
        %2011 = vmatprep.subr.bf16.mxu0 0
        %2012 = vmatpush1.bf16.msra.mxu0 0
        %2013 = vmatprep.subr.bf16.mxu0 0
        %2014 = vmatpush1.bf16.msra.mxu0 0
        %2015 = vmatprep.subr.bf16.mxu0 0
        %2016 = vmatpush1.bf16.msra.mxu0 0
        %2017 = vmatprep.subr.bf16.mxu0 0
        %2018 = vmatpush1.bf16.msra.mxu0 0
        %2019 = vmatprep.mubr.bf16.mxu0 0
        %2020 = vmatmul.mubr.bf16.gmra.mrb[0].mxu0 %v1981
        %v2021 = vpop.f32.mrb[0].mxu0
        %v2022 = vadd.f32 0.0, %v2021
        %v2023 = vpop.f32.mrb[0].mxu0
        %v2024 = vpop.f32.mrb[0].mxu0
        %v2025 = vpop.f32.mrb[0].mxu0
        %2026 = vdwg.mxu0
        %v2028 = vsel %vm1476, %v1973, 0
        %v2031 = vsel %vm1983, %v1469, 0
        %2033 = vmatprep.subr.bf16.mxu0 0
        %2034 = vmatpush1.bf16.msra.mxu0 %v2031
        %2035 = vmatprep.subr.bf16.mxu0 0
        %2036 = vmatpush1.bf16.msra.mxu0 0
        %2037 = vmatprep.subr.bf16.mxu0 0
        %2038 = vmatpush1.bf16.msra.mxu0 0
        %2039 = vmatprep.subr.bf16.mxu0 0
        %2040 = vmatpush1.bf16.msra.mxu0 0
        %2041 = vmatprep.subr.bf16.mxu0 0
        %2042 = vmatpush1.bf16.msra.mxu0 0
        %2043 = vmatprep.subr.bf16.mxu0 0
        %2044 = vmatpush1.bf16.msra.mxu0 0
        %2045 = vmatprep.subr.bf16.mxu0 0
        %2046 = vmatpush1.bf16.msra.mxu0 0
        %2047 = vmatprep.subr.bf16.mxu0 0
        %2048 = vmatpush1.bf16.msra.mxu0 0
        %2049 = vmatprep.subr.bf16.mxu0 0
        %2050 = vmatpush1.bf16.msra.mxu0 0
        %2051 = vmatprep.subr.bf16.mxu0 0
        %2052 = vmatpush1.bf16.msra.mxu0 0
        %2053 = vmatprep.subr.bf16.mxu0 0
        %2054 = vmatpush1.bf16.msra.mxu0 0
        %2055 = vmatprep.subr.bf16.mxu0 0
        %2056 = vmatpush1.bf16.msra.mxu0 0
        %2057 = vmatprep.subr.bf16.mxu0 0
        %2058 = vmatpush1.bf16.msra.mxu0 0
        %2059 = vmatprep.subr.bf16.mxu0 0
        %2060 = vmatpush1.bf16.msra.mxu0 0
        %2061 = vmatprep.subr.bf16.mxu0 0
        %2062 = vmatpush1.bf16.msra.mxu0 0
        %2063 = vmatprep.subr.bf16.mxu0 0
        %2064 = vmatpush1.bf16.msra.mxu0 0
        %2065 = vmatprep.mubr.bf16.mxu0 0
        %2066 = vmatmul.mubr.bf16.gmra.mrb[0].mxu0 %v2028
        %v2067 = vpop.f32.mrb[0].mxu0
        %v2068 = vadd.f32 0.0, %v2067
        %v2069 = vpop.f32.mrb[0].mxu0
        %v2070 = vpop.f32.mrb[0].mxu0
        %v2071 = vpop.f32.mrb[0].mxu0
        %2072 = vdwg.mxu0
        %v2074 = vsel %vm1476, %v1974, 0
        %v2077 = vsel %vm1983, %v1470, 0
        %2079 = vmatprep.subr.bf16.mxu0 0
        %2080 = vmatpush1.bf16.msra.mxu0 %v2077
        %2081 = vmatprep.subr.bf16.mxu0 0
        %2082 = vmatpush1.bf16.msra.mxu0 0
        %2083 = vmatprep.subr.bf16.mxu0 0
        %2084 = vmatpush1.bf16.msra.mxu0 0
        %2085 = vmatprep.subr.bf16.mxu0 0
        %2086 = vmatpush1.bf16.msra.mxu0 0
        %2087 = vmatprep.subr.bf16.mxu0 0
        %2088 = vmatpush1.bf16.msra.mxu0 0
        %2089 = vmatprep.subr.bf16.mxu0 0
        %2090 = vmatpush1.bf16.msra.mxu0 0
        %2091 = vmatprep.subr.bf16.mxu0 0
        %2092 = vmatpush1.bf16.msra.mxu0 0
        %2093 = vmatprep.subr.bf16.mxu0 0
        %2094 = vmatpush1.bf16.msra.mxu0 0
        %2095 = vmatprep.subr.bf16.mxu0 0
        %2096 = vmatpush1.bf16.msra.mxu0 0
        %2097 = vmatprep.subr.bf16.mxu0 0
        %2098 = vmatpush1.bf16.msra.mxu0 0
        %2099 = vmatprep.subr.bf16.mxu0 0
        %2100 = vmatpush1.bf16.msra.mxu0 0
        %2101 = vmatprep.subr.bf16.mxu0 0
        %2102 = vmatpush1.bf16.msra.mxu0 0
        %2103 = vmatprep.subr.bf16.mxu0 0
        %2104 = vmatpush1.bf16.msra.mxu0 0
        %2105 = vmatprep.subr.bf16.mxu0 0
        %2106 = vmatpush1.bf16.msra.mxu0 0
        %2107 = vmatprep.subr.bf16.mxu0 0
        %2108 = vmatpush1.bf16.msra.mxu0 0
        %2109 = vmatprep.subr.bf16.mxu0 0
        %2110 = vmatpush1.bf16.msra.mxu0 0
        %2111 = vmatprep.mubr.bf16.mxu0 0
        %2112 = vmatmul.mubr.bf16.gmra.mrb[0].mxu0 %v2074
        %v2113 = vpop.f32.mrb[0].mxu0
        %v2114 = vadd.f32 0.0, %v2113
        %v2115 = vpop.f32.mrb[0].mxu0
        %v2116 = vpop.f32.mrb[0].mxu0
        %v2117 = vpop.f32.mrb[0].mxu0
        %2118 = vdwg.mxu0
        %v2120 = vsel %vm1476, %v1975, 0
        %v2123 = vsel %vm1983, %v1471, 0
        %2125 = vmatprep.subr.bf16.mxu0 0
        %2126 = vmatpush1.bf16.msra.mxu0 %v2123
        %2127 = vmatprep.subr.bf16.mxu0 0
        %2128 = vmatpush1.bf16.msra.mxu0 0
        %2129 = vmatprep.subr.bf16.mxu0 0
        %2130 = vmatpush1.bf16.msra.mxu0 0
        %2131 = vmatprep.subr.bf16.mxu0 0
        %2132 = vmatpush1.bf16.msra.mxu0 0
        %2133 = vmatprep.subr.bf16.mxu0 0
        %2134 = vmatpush1.bf16.msra.mxu0 0
        %2135 = vmatprep.subr.bf16.mxu0 0
        %2136 = vmatpush1.bf16.msra.mxu0 0
        %2137 = vmatprep.subr.bf16.mxu0 0
        %2138 = vmatpush1.bf16.msra.mxu0 0
        %2139 = vmatprep.subr.bf16.mxu0 0
        %2140 = vmatpush1.bf16.msra.mxu0 0
        %2141 = vmatprep.subr.bf16.mxu0 0
        %2142 = vmatpush1.bf16.msra.mxu0 0
        %2143 = vmatprep.subr.bf16.mxu0 0
        %2144 = vmatpush1.bf16.msra.mxu0 0
        %2145 = vmatprep.subr.bf16.mxu0 0
        %2146 = vmatpush1.bf16.msra.mxu0 0
        %2147 = vmatprep.subr.bf16.mxu0 0
        %2148 = vmatpush1.bf16.msra.mxu0 0
        %2149 = vmatprep.subr.bf16.mxu0 0
        %2150 = vmatpush1.bf16.msra.mxu0 0
        %2151 = vmatprep.subr.bf16.mxu0 0
        %2152 = vmatpush1.bf16.msra.mxu0 0
        %2153 = vmatprep.subr.bf16.mxu0 0
        %2154 = vmatpush1.bf16.msra.mxu0 0
        %2155 = vmatprep.subr.bf16.mxu0 0
        %2156 = vmatpush1.bf16.msra.mxu0 0
        %2157 = vmatprep.mubr.bf16.mxu0 0
        %2158 = vmatmul.mubr.bf16.gmra.mrb[0].mxu0 %v2120
        %v2159 = vpop.f32.mrb[0].mxu0
        %v2160 = vadd.f32 0.0, %v2159
        %v2161 = vpop.f32.mrb[0].mxu0
        %v2162 = vpop.f32.mrb[0].mxu0
        %v2163 = vpop.f32.mrb[0].mxu0
        %2164 = vdwg.mxu0
        %v2166 = vsel %vm1476, %v1976, 0
        %v2169 = vsel %vm1983, %v1472, 0
        %2171 = vmatprep.subr.bf16.mxu0 0
        %2172 = vmatpush1.bf16.msra.mxu0 %v2169
        %2173 = vmatprep.subr.bf16.mxu0 0
        %2174 = vmatpush1.bf16.msra.mxu0 0
        %2175 = vmatprep.subr.bf16.mxu0 0
        %2176 = vmatpush1.bf16.msra.mxu0 0
        %2177 = vmatprep.subr.bf16.mxu0 0
        %2178 = vmatpush1.bf16.msra.mxu0 0
        %2179 = vmatprep.subr.bf16.mxu0 0
        %2180 = vmatpush1.bf16.msra.mxu0 0
        %2181 = vmatprep.subr.bf16.mxu0 0
        %2182 = vmatpush1.bf16.msra.mxu0 0
        %2183 = vmatprep.subr.bf16.mxu0 0
        %2184 = vmatpush1.bf16.msra.mxu0 0
        %2185 = vmatprep.subr.bf16.mxu0 0
        %2186 = vmatpush1.bf16.msra.mxu0 0
        %2187 = vmatprep.subr.bf16.mxu0 0
        %2188 = vmatpush1.bf16.msra.mxu0 0
        %2189 = vmatprep.subr.bf16.mxu0 0
        %2190 = vmatpush1.bf16.msra.mxu0 0
        %2191 = vmatprep.subr.bf16.mxu0 0
        %2192 = vmatpush1.bf16.msra.mxu0 0
        %2193 = vmatprep.subr.bf16.mxu0 0
        %2194 = vmatpush1.bf16.msra.mxu0 0
        %2195 = vmatprep.subr.bf16.mxu0 0
        %2196 = vmatpush1.bf16.msra.mxu0 0
        %2197 = vmatprep.subr.bf16.mxu0 0
        %2198 = vmatpush1.bf16.msra.mxu0 0
        %2199 = vmatprep.subr.bf16.mxu0 0
        %2200 = vmatpush1.bf16.msra.mxu0 0
        %2201 = vmatprep.subr.bf16.mxu0 0
        %2202 = vmatpush1.bf16.msra.mxu0 0
        %2203 = vmatprep.mubr.bf16.mxu0 0
        %2204 = vmatmul.mubr.bf16.gmra.mrb[0].mxu0 %v2166
        %v2205 = vpop.f32.mrb[0].mxu0
        %v2206 = vadd.f32 0.0, %v2205
        %v2207 = vpop.f32.mrb[0].mxu0
        %v2208 = vpop.f32.mrb[0].mxu0
        %v2209 = vpop.f32.mrb[0].mxu0
        %2210 = vdwg.mxu0
        %v2212 = vsel %vm1476, %v1977, 0
        %v2215 = vsel %vm1983, %v1473, 0
        %2217 = vmatprep.subr.bf16.mxu0 0
        %2218 = vmatpush1.bf16.msra.mxu0 %v2215
        %2219 = vmatprep.subr.bf16.mxu0 0
        %2220 = vmatpush1.bf16.msra.mxu0 0
        %2221 = vmatprep.subr.bf16.mxu0 0
        %2222 = vmatpush1.bf16.msra.mxu0 0
        %2223 = vmatprep.subr.bf16.mxu0 0
        %2224 = vmatpush1.bf16.msra.mxu0 0
        %2225 = vmatprep.subr.bf16.mxu0 0
        %2226 = vmatpush1.bf16.msra.mxu0 0
        %2227 = vmatprep.subr.bf16.mxu0 0
        %2228 = vmatpush1.bf16.msra.mxu0 0
        %2229 = vmatprep.subr.bf16.mxu0 0
        %2230 = vmatpush1.bf16.msra.mxu0 0
        %2231 = vmatprep.subr.bf16.mxu0 0
        %2232 = vmatpush1.bf16.msra.mxu0 0
        %2233 = vmatprep.subr.bf16.mxu0 0
        %2234 = vmatpush1.bf16.msra.mxu0 0
        %2235 = vmatprep.subr.bf16.mxu0 0
        %2236 = vmatpush1.bf16.msra.mxu0 0
        %2237 = vmatprep.subr.bf16.mxu0 0
        %2238 = vmatpush1.bf16.msra.mxu0 0
        %2239 = vmatprep.subr.bf16.mxu0 0
        %2240 = vmatpush1.bf16.msra.mxu0 0
        %2241 = vmatprep.subr.bf16.mxu0 0
        %2242 = vmatpush1.bf16.msra.mxu0 0
        %2243 = vmatprep.subr.bf16.mxu0 0
        %2244 = vmatpush1.bf16.msra.mxu0 0
        %2245 = vmatprep.subr.bf16.mxu0 0
        %2246 = vmatpush1.bf16.msra.mxu0 0
        %2247 = vmatprep.subr.bf16.mxu0 0
        %2248 = vmatpush1.bf16.msra.mxu0 0
        %2249 = vmatprep.mubr.bf16.mxu0 0
        %2250 = vmatmul.mubr.bf16.gmra.mrb[0].mxu0 %v2212
        %v2251 = vpop.f32.mrb[0].mxu0
        %v2252 = vadd.f32 0.0, %v2251
        %v2253 = vpop.f32.mrb[0].mxu0
        %v2254 = vpop.f32.mrb[0].mxu0
        %v2255 = vpop.f32.mrb[0].mxu0
        %2256 = vdwg.mxu0
        %v2258 = vsel %vm1476, %v1978, 0
        %v2261 = vsel %vm1983, %v1474, 0
        %2263 = vmatprep.subr.bf16.mxu0 0
        %2264 = vmatpush1.bf16.msra.mxu0 %v2261
        %2265 = vmatprep.subr.bf16.mxu0 0
        %2266 = vmatpush1.bf16.msra.mxu0 0
        %2267 = vmatprep.subr.bf16.mxu0 0
        %2268 = vmatpush1.bf16.msra.mxu0 0
        %2269 = vmatprep.subr.bf16.mxu0 0
        %2270 = vmatpush1.bf16.msra.mxu0 0
        %2271 = vmatprep.subr.bf16.mxu0 0
        %2272 = vmatpush1.bf16.msra.mxu0 0
        %2273 = vmatprep.subr.bf16.mxu0 0
        %2274 = vmatpush1.bf16.msra.mxu0 0
        %2275 = vmatprep.subr.bf16.mxu0 0
        %2276 = vmatpush1.bf16.msra.mxu0 0
        %2277 = vmatprep.subr.bf16.mxu0 0
        %2278 = vmatpush1.bf16.msra.mxu0 0
        %2279 = vmatprep.subr.bf16.mxu0 0
        %2280 = vmatpush1.bf16.msra.mxu0 0
        %2281 = vmatprep.subr.bf16.mxu0 0
        %2282 = vmatpush1.bf16.msra.mxu0 0
        %2283 = vmatprep.subr.bf16.mxu0 0
        %2284 = vmatpush1.bf16.msra.mxu0 0
        %2285 = vmatprep.subr.bf16.mxu0 0
        %2286 = vmatpush1.bf16.msra.mxu0 0
        %2287 = vmatprep.subr.bf16.mxu0 0
        %2288 = vmatpush1.bf16.msra.mxu0 0
        %2289 = vmatprep.subr.bf16.mxu0 0
        %2290 = vmatpush1.bf16.msra.mxu0 0
        %2291 = vmatprep.subr.bf16.mxu0 0
        %2292 = vmatpush1.bf16.msra.mxu0 0
        %2293 = vmatprep.subr.bf16.mxu0 0
        %2294 = vmatpush1.bf16.msra.mxu0 0
        %2295 = vmatprep.mubr.bf16.mxu0 0
        %2296 = vmatmul.mubr.bf16.gmra.mrb[0].mxu0 %v2258
        %v2297 = vpop.f32.mrb[0].mxu0
        %v2298 = vadd.f32 0.0, %v2297
        %v2299 = vpop.f32.mrb[0].mxu0
        %v2300 = vpop.f32.mrb[0].mxu0
        %v2301 = vpop.f32.mrb[0].mxu0
        %2302 = vdwg.mxu0
        %v2304 = vsel %vm1476, %v1979, 0
        %v2307 = vsel %vm1983, %v1475, 0
        %2309 = vmatprep.subr.bf16.mxu0 0
        %2310 = vmatpush1.bf16.msra.mxu0 %v2307
        %2311 = vmatprep.subr.bf16.mxu0 0
        %2312 = vmatpush1.bf16.msra.mxu0 0
        %2313 = vmatprep.subr.bf16.mxu0 0
        %2314 = vmatpush1.bf16.msra.mxu0 0
        %2315 = vmatprep.subr.bf16.mxu0 0
        %2316 = vmatpush1.bf16.msra.mxu0 0
        %2317 = vmatprep.subr.bf16.mxu0 0
        %2318 = vmatpush1.bf16.msra.mxu0 0
        %2319 = vmatprep.subr.bf16.mxu0 0
        %2320 = vmatpush1.bf16.msra.mxu0 0
        %2321 = vmatprep.subr.bf16.mxu0 0
        %2322 = vmatpush1.bf16.msra.mxu0 0
        %2323 = vmatprep.subr.bf16.mxu0 0
        %2324 = vmatpush1.bf16.msra.mxu0 0
        %2325 = vmatprep.subr.bf16.mxu0 0
        %2326 = vmatpush1.bf16.msra.mxu0 0
        %2327 = vmatprep.subr.bf16.mxu0 0
        %2328 = vmatpush1.bf16.msra.mxu0 0
        %2329 = vmatprep.subr.bf16.mxu0 0
        %2330 = vmatpush1.bf16.msra.mxu0 0
        %2331 = vmatprep.subr.bf16.mxu0 0
        %2332 = vmatpush1.bf16.msra.mxu0 0
        %2333 = vmatprep.subr.bf16.mxu0 0
        %2334 = vmatpush1.bf16.msra.mxu0 0
        %2335 = vmatprep.subr.bf16.mxu0 0
        %2336 = vmatpush1.bf16.msra.mxu0 0
        %2337 = vmatprep.subr.bf16.mxu0 0
        %2338 = vmatpush1.bf16.msra.mxu0 0
        %2339 = vmatprep.subr.bf16.mxu0 0
        %2340 = vmatpush1.bf16.msra.mxu0 0
        %2341 = vmatprep.mubr.bf16.mxu0 0
        %2342 = vmatmul.mubr.bf16.gmra.mrb[0].mxu0 %v2304
        %v2343 = vpop.f32.mrb[0].mxu0
        %v2344 = vadd.f32 0.0, %v2343
        %v2345 = vpop.f32.mrb[0].mxu0
        %v2346 = vpop.f32.mrb[0].mxu0
        %v2347 = vpop.f32.mrb[0].mxu0
        %2348 = vdwg.mxu0
        %v2349 = vadd.f32 %v1932, %v2022
        %v2350 = vadd.f32 %v1933, %v2068
        %v2351 = vadd.f32 %v1934, %v2114
        %v2352 = vadd.f32 %v1935, %v2160
        %v2353 = vadd.f32 %v1936, %v2206
        %v2354 = vadd.f32 %v1937, %v2252
        %v2355 = vadd.f32 %v1938, %v2298
        %v2356 = vadd.f32 %v1939, %v2344
        %v2357 = vrcp.pop %v1964
        %v2358 = vmul.f32 %v2349, %v2357
        %v2359 = vrcp.pop %v1965
        %v2360 = vmul.f32 %v2350, %v2359
        %v2361 = vrcp.pop %v1966
        %v2362 = vmul.f32 %v2351, %v2361
        %v2363 = vrcp.pop %v1967
        %v2364 = vmul.f32 %v2352, %v2363
        %v2365 = vrcp.pop %v1968
        %v2366 = vmul.f32 %v2353, %v2365
        %v2367 = vrcp.pop %v1969
        %v2368 = vmul.f32 %v2354, %v2367
        %v2369 = vrcp.pop %v1970
        %v2370 = vmul.f32 %v2355, %v2369
        %v2371 = vrcp.pop %v1971
        %v2372 = vmul.f32 %v2356, %v2371
        %v2373 = vcombine.low %v2358, %v2362
        %v2374 = vcombine.high %v2358, %v2362
        %v2376 = vunpack.c.l.s4 1983009808
        %v2377 = vunpack.c.0.s8 %v2376
        %v2378 = vlaneseq
        %v2379 = vshrl.u32 %v2378, 7
        %v2380 = vsub.s32 %v2377, %v2379
        %v2381 = vrot.slane %v2373, %v2380
        %v2383 = vunpack.c.l.s4 1983009808
        %v2384 = vunpack.c.0.s8 %v2383
        %v2385 = vlaneseq
        %v2386 = vshrl.u32 %v2385, 7
        %v2387 = vsub.s32 %v2384, %v2386
        %v2388 = vrot.slane %v2374, %v2387
        %v2389 = vcombine.low %v2360, %v2364
        %v2390 = vcombine.high %v2360, %v2364
        %v2392 = vunpack.c.l.s4 1983009808
        %v2393 = vunpack.c.0.s8 %v2392
        %v2394 = vlaneseq
        %v2395 = vshrl.u32 %v2394, 7
        %v2396 = vsub.s32 %v2393, %v2395
        %v2397 = vrot.slane %v2389, %v2396
        %v2399 = vunpack.c.l.s4 1983009808
        %v2400 = vunpack.c.0.s8 %v2399
        %v2401 = vlaneseq
        %v2402 = vshrl.u32 %v2401, 7
        %v2403 = vsub.s32 %v2400, %v2402
        %v2404 = vrot.slane %v2390, %v2403
        %v2405 = vcombine.low %v2381, %v2397
        %v2406 = vcombine.high %v2381, %v2397
        %v2408 = vunpack.c.l.s4 1934713408
        %v2409 = vunpack.c.0.s8 %v2408
        %v2410 = vlaneseq
        %v2411 = vshrl.u32 %v2410, 7
        %v2412 = vsub.s32 %v2409, %v2411
        %v2413 = vrot.slane %v2405, %v2412
        %v2415 = vunpack.c.l.s4 1934713408
        %v2416 = vunpack.c.0.s8 %v2415
        %v2417 = vlaneseq
        %v2418 = vshrl.u32 %v2417, 7
        %v2419 = vsub.s32 %v2416, %v2418
        %v2420 = vrot.slane %v2406, %v2419
        %v2421 = vcombine.low %v2388, %v2404
        %v2422 = vcombine.high %v2388, %v2404
        %v2424 = vunpack.c.l.s4 1934713408
        %v2425 = vunpack.c.0.s8 %v2424
        %v2426 = vlaneseq
        %v2427 = vshrl.u32 %v2426, 7
        %v2428 = vsub.s32 %v2425, %v2427
        %v2429 = vrot.slane %v2421, %v2428
        %v2431 = vunpack.c.l.s4 1934713408
        %v2432 = vunpack.c.0.s8 %v2431
        %v2433 = vlaneseq
        %v2434 = vshrl.u32 %v2433, 7
        %v2435 = vsub.s32 %v2432, %v2434
        %v2436 = vrot.slane %v2422, %v2435
        %v2437 = vcombine.high %v2413, 0.0
        %v2438 = vcombine.high %v2420, 0.0
        %v2439 = vcombine.high %v2429, 0.0
        %v2440 = vcombine.high %v2436, 0.0
        %v2441 = vcombine.low %v2366, %v2370
        %v2442 = vcombine.high %v2366, %v2370
        %v2444 = vunpack.c.l.s4 1983009808
        %v2445 = vunpack.c.0.s8 %v2444
        %v2446 = vlaneseq
        %v2447 = vshrl.u32 %v2446, 7
        %v2448 = vsub.s32 %v2445, %v2447
        %v2449 = vrot.slane %v2441, %v2448
        %v2451 = vunpack.c.l.s4 1983009808
        %v2452 = vunpack.c.0.s8 %v2451
        %v2453 = vlaneseq
        %v2454 = vshrl.u32 %v2453, 7
        %v2455 = vsub.s32 %v2452, %v2454
        %v2456 = vrot.slane %v2442, %v2455
        %v2457 = vcombine.low %v2368, %v2372
        %v2458 = vcombine.high %v2368, %v2372
        %v2460 = vunpack.c.l.s4 1983009808
        %v2461 = vunpack.c.0.s8 %v2460
        %v2462 = vlaneseq
        %v2463 = vshrl.u32 %v2462, 7
        %v2464 = vsub.s32 %v2461, %v2463
        %v2465 = vrot.slane %v2457, %v2464
        %v2467 = vunpack.c.l.s4 1983009808
        %v2468 = vunpack.c.0.s8 %v2467
        %v2469 = vlaneseq
        %v2470 = vshrl.u32 %v2469, 7
        %v2471 = vsub.s32 %v2468, %v2470
        %v2472 = vrot.slane %v2458, %v2471
        %v2473 = vcombine.low %v2449, %v2465
        %v2474 = vcombine.high %v2449, %v2465
        %v2476 = vunpack.c.l.s4 1934713408
        %v2477 = vunpack.c.0.s8 %v2476
        %v2478 = vlaneseq
        %v2479 = vshrl.u32 %v2478, 7
        %v2480 = vsub.s32 %v2477, %v2479
        %v2481 = vrot.slane %v2473, %v2480
        %v2483 = vunpack.c.l.s4 1934713408
        %v2484 = vunpack.c.0.s8 %v2483
        %v2485 = vlaneseq
        %v2486 = vshrl.u32 %v2485, 7
        %v2487 = vsub.s32 %v2484, %v2486
        %v2488 = vrot.slane %v2474, %v2487
        %v2489 = vcombine.low %v2456, %v2472
        %v2490 = vcombine.high %v2456, %v2472
        %v2492 = vunpack.c.l.s4 1934713408
        %v2493 = vunpack.c.0.s8 %v2492
        %v2494 = vlaneseq
        %v2495 = vshrl.u32 %v2494, 7
        %v2496 = vsub.s32 %v2493, %v2495
        %v2497 = vrot.slane %v2489, %v2496
        %v2499 = vunpack.c.l.s4 1934713408
        %v2500 = vunpack.c.0.s8 %v2499
        %v2501 = vlaneseq
        %v2502 = vshrl.u32 %v2501, 7
        %v2503 = vsub.s32 %v2500, %v2502
        %v2504 = vrot.slane %v2490, %v2503
        %v2505 = vcombine.high %v2481, 0.0
        %v2506 = vcombine.high %v2488, 0.0
        %v2507 = vcombine.high %v2497, 0.0
        %v2508 = vcombine.high %v2504, 0.0
        %v2509 = vcombine.low %v2413, %v2420
        %v2511 = vunpack.c.l.s4 1983009808
        %v2512 = vunpack.c.0.s8 %v2511
        %v2513 = vlaneseq
        %v2514 = vshrl.u32 %v2513, 7
        %v2515 = vsub.s32 %v2512, %v2514
        %v2516 = vrot.slane %v2509, %v2515
        %v2517 = vcombine.low %v2437, %v2438
        %v2519 = vunpack.c.l.s4 1983009808
        %v2520 = vunpack.c.0.s8 %v2519
        %v2521 = vlaneseq
        %v2522 = vshrl.u32 %v2521, 7
        %v2523 = vsub.s32 %v2520, %v2522
        %v2524 = vrot.slane %v2517, %v2523
        %v2525 = vcombine.low %v2429, %v2436
        %v2527 = vunpack.c.l.s4 1983009808
        %v2528 = vunpack.c.0.s8 %v2527
        %v2529 = vlaneseq
        %v2530 = vshrl.u32 %v2529, 7
        %v2531 = vsub.s32 %v2528, %v2530
        %v2532 = vrot.slane %v2525, %v2531
        %v2533 = vcombine.low %v2439, %v2440
        %v2535 = vunpack.c.l.s4 1983009808
        %v2536 = vunpack.c.0.s8 %v2535
        %v2537 = vlaneseq
        %v2538 = vshrl.u32 %v2537, 7
        %v2539 = vsub.s32 %v2536, %v2538
        %v2540 = vrot.slane %v2533, %v2539
        %v2541 = vcombine.low %v2516, %v2524
        %v2542 = vcombine.high %v2516, %v2524
        %v2544 = vunpack.c.l.s4 1934713408
        %v2545 = vunpack.c.0.s8 %v2544
        %v2546 = vlaneseq
        %v2547 = vshrl.u32 %v2546, 7
        %v2548 = vsub.s32 %v2545, %v2547
        %v2549 = vrot.slane %v2541, %v2548
        %v2551 = vunpack.c.l.s4 1934713408
        %v2552 = vunpack.c.0.s8 %v2551
        %v2553 = vlaneseq
        %v2554 = vshrl.u32 %v2553, 7
        %v2555 = vsub.s32 %v2552, %v2554
        %v2556 = vrot.slane %v2542, %v2555
        %v2557 = vcombine.low %v2532, %v2540
        %v2558 = vcombine.high %v2532, %v2540
        %v2560 = vunpack.c.l.s4 1934713408
        %v2561 = vunpack.c.0.s8 %v2560
        %v2562 = vlaneseq
        %v2563 = vshrl.u32 %v2562, 7
        %v2564 = vsub.s32 %v2561, %v2563
        %v2565 = vrot.slane %v2557, %v2564
        %v2567 = vunpack.c.l.s4 1934713408
        %v2568 = vunpack.c.0.s8 %v2567
        %v2569 = vlaneseq
        %v2570 = vshrl.u32 %v2569, 7
        %v2571 = vsub.s32 %v2568, %v2570
        %v2572 = vrot.slane %v2558, %v2571
        %v2573 = vcombine.low %v2549, %v2565
        %v2574 = vcombine.high %v2549, %v2565
        %v2575 = vcombine.low %v2556, %v2572
        %v2576 = vcombine.high %v2556, %v2572
        %v2577 = vcombine.low %v2481, %v2488
        %v2579 = vunpack.c.l.s4 1983009808
        %v2580 = vunpack.c.0.s8 %v2579
        %v2581 = vlaneseq
        %v2582 = vshrl.u32 %v2581, 7
        %v2583 = vsub.s32 %v2580, %v2582
        %v2584 = vrot.slane %v2577, %v2583
        %v2585 = vcombine.low %v2505, %v2506
        %v2587 = vunpack.c.l.s4 1983009808
        %v2588 = vunpack.c.0.s8 %v2587
        %v2589 = vlaneseq
        %v2590 = vshrl.u32 %v2589, 7
        %v2591 = vsub.s32 %v2588, %v2590
        %v2592 = vrot.slane %v2585, %v2591
        %v2593 = vcombine.low %v2497, %v2504
        %v2595 = vunpack.c.l.s4 1983009808
        %v2596 = vunpack.c.0.s8 %v2595
        %v2597 = vlaneseq
        %v2598 = vshrl.u32 %v2597, 7
        %v2599 = vsub.s32 %v2596, %v2598
        %v2600 = vrot.slane %v2593, %v2599
        %v2601 = vcombine.low %v2507, %v2508
        %v2603 = vunpack.c.l.s4 1983009808
        %v2604 = vunpack.c.0.s8 %v2603
        %v2605 = vlaneseq
        %v2606 = vshrl.u32 %v2605, 7
        %v2607 = vsub.s32 %v2604, %v2606
        %v2608 = vrot.slane %v2601, %v2607
        %v2609 = vcombine.low %v2584, %v2592
        %v2610 = vcombine.high %v2584, %v2592
        %v2612 = vunpack.c.l.s4 1934713408
        %v2613 = vunpack.c.0.s8 %v2612
        %v2614 = vlaneseq
        %v2615 = vshrl.u32 %v2614, 7
        %v2616 = vsub.s32 %v2613, %v2615
        %v2617 = vrot.slane %v2609, %v2616
        %v2619 = vunpack.c.l.s4 1934713408
        %v2620 = vunpack.c.0.s8 %v2619
        %v2621 = vlaneseq
        %v2622 = vshrl.u32 %v2621, 7
        %v2623 = vsub.s32 %v2620, %v2622
        %v2624 = vrot.slane %v2610, %v2623
        %v2625 = vcombine.low %v2600, %v2608
        %v2626 = vcombine.high %v2600, %v2608
        %v2628 = vunpack.c.l.s4 1934713408
        %v2629 = vunpack.c.0.s8 %v2628
        %v2630 = vlaneseq
        %v2631 = vshrl.u32 %v2630, 7
        %v2632 = vsub.s32 %v2629, %v2631
        %v2633 = vrot.slane %v2625, %v2632
        %v2635 = vunpack.c.l.s4 1934713408
        %v2636 = vunpack.c.0.s8 %v2635
        %v2637 = vlaneseq
        %v2638 = vshrl.u32 %v2637, 7
        %v2639 = vsub.s32 %v2636, %v2638
        %v2640 = vrot.slane %v2626, %v2639
        %v2641 = vcombine.low %v2617, %v2633
        %v2642 = vcombine.high %v2617, %v2633
        %v2643 = vcombine.low %v2624, %v2640
        %v2644 = vcombine.high %v2624, %v2640
        %2647 = vrot.lane.b32.xlu0 %v2574, 8
        %v2648 = vpop.permute.xlu0 %2647
        %2649 = vrot.lane.b32.xlu0 %v2642, 8
        %v2650 = vpop.permute.xlu0 %2649
        %2655 = vrot.lane.b32.xlu0 %v2575, 16
        %v2656 = vpop.permute.xlu0 %2655
        %2657 = vrot.lane.b32.xlu0 %v2643, 16
        %v2658 = vpop.permute.xlu0 %2657
        %2663 = vrot.lane.b32.xlu0 %v2576, 24
        %v2664 = vpop.permute.xlu0 %2663
        %2665 = vrot.lane.b32.xlu0 %v2644, 24
        %v2666 = vpop.permute.xlu0 %2665
        %v2669 = vsel %vm1476, %v2573, %v2648
        %v2670 = vsel %vm1476, %v2641, %v2650
        %vm2671 = vcmask 130048
        %v2672 = vsel %vm2671, %v2669, %v2656
        %v2673 = vsel %vm2671, %v2670, %v2658
        %vm2674 = vcmask 195584
        %v2675 = vsel %vm2674, %v2672, %v2664
        %v2676 = vsel %vm2674, %v2673, %v2666
        %s2677 = scalar_lea.vmem %s321, 48
        %v2678 = vld [vmem:[%s2677] sm:$0xf]
        %v2679 = vld [vmem:[%s2677 + $0x4] sm:$0xf]
        %v2680 = vld [vmem:[%s2677 + $0x8] sm:$0xf]
        %v2681 = vld [vmem:[%s2677 + $0xc] sm:$0xf]
        %v2682 = vpack.c.bf16 %v2676, %v2675
        %v2683 = vlaneseq
        %v2684 = vshrl.u32 %v2683, 7
        %v2685 = vsub.s32 3, %v2684
        %v2686 = vrot.slane %v345, %v2685
        %v2691 = vunpack.c.l.b16 %v2678
        %v2692 = vunpack.c.l.b16 %v2679
        %v2693 = vunpack.c.l.b16 %v2680
        %v2694 = vunpack.c.l.b16 %v2681
        %v2695 = vpack.c.b16 %v2692, %v2691
        %v2696 = vpack.c.b16 %v2694, %v2693
        %v2700 = vsel %vm347, %v2682, 0
        %2702 = vmatprep.subr.bf16.mxu0 0
        %2703 = vmatpush1.bf16.msra.mxu0 %v2695
        %2704 = vmatprep.subr.bf16.mxu0 0
        %2705 = vmatpush1.bf16.msra.mxu0 %v2696
        %2706 = vmatprep.subr.bf16.mxu0 0
        %2707 = vmatpush1.bf16.msra.mxu0 0
        %2708 = vmatprep.subr.bf16.mxu0 0
        %2709 = vmatpush1.bf16.msra.mxu0 0
        %2710 = vmatprep.subr.bf16.mxu0 0
        %2711 = vmatpush1.bf16.msra.mxu0 0
        %2712 = vmatprep.subr.bf16.mxu0 0
        %2713 = vmatpush1.bf16.msra.mxu0 0
        %2714 = vmatprep.subr.bf16.mxu0 0
        %2715 = vmatpush1.bf16.msra.mxu0 0
        %2716 = vmatprep.subr.bf16.mxu0 0
        %2717 = vmatpush1.bf16.msra.mxu0 0
        %2718 = vmatprep.subr.bf16.mxu0 0
        %2719 = vmatpush1.bf16.msra.mxu0 0
        %2720 = vmatprep.subr.bf16.mxu0 0
        %2721 = vmatpush1.bf16.msra.mxu0 0
        %2722 = vmatprep.subr.bf16.mxu0 0
        %2723 = vmatpush1.bf16.msra.mxu0 0
        %2724 = vmatprep.subr.bf16.mxu0 0
        %2725 = vmatpush1.bf16.msra.mxu0 0
        %2726 = vmatprep.subr.bf16.mxu0 0
        %2727 = vmatpush1.bf16.msra.mxu0 0
        %2728 = vmatprep.subr.bf16.mxu0 0
        %2729 = vmatpush1.bf16.msra.mxu0 0
        %2730 = vmatprep.subr.bf16.mxu0 0
        %2731 = vmatpush1.bf16.msra.mxu0 0
        %2732 = vmatprep.subr.bf16.mxu0 0
        %2733 = vmatpush1.bf16.msra.mxu0 0
        %2734 = vmatprep.mubr.bf16.mxu0 0
        %2735 = vmatmul.mubr.bf16.gmra.mrb[0].mxu0 %v2700
        %v2736 = vpop.f32.mrb[0].mxu0
        %v2737 = vadd.f32 %v2686, %v2736
        %v2738 = vpop.f32.mrb[0].mxu0
        %v2739 = vpop.f32.mrb[0].mxu0
        %v2740 = vadd.f32 %v2686, %v2739
        %v2741 = vpop.f32.mrb[0].mxu0
        %2742 = vdwg.mxu0
        %v2743 = vadd.f32 %v2737, %v385
        %v2744 = vadd.f32 %v2740, %v386
        %v2745 = vsel %vm347, %v2743, 0.0
        %2746 = vadd.xlane.f32.xlu0 %v2745
        %v2747 = vpop.xlane.xlu0 %2746
        %v2748 = vsel %vm347, %v2744, 0.0
        %2749 = vadd.xlane.f32.xlu0 %v2748
        %v2750 = vpop.xlane.xlu0 %2749
        %v2751 = vmul.f32 %v2747, %v354
        %v2752 = vmul.f32 %v2750, %v354
        %v2753 = vsub.f32 %v2743, %v2751
        %v2754 = vsub.f32 %v2744, %v2752
        %v2755 = vmul.f32 %v2753, %v2753
        %v2756 = vmul.f32 %v2754, %v2754
        %v2757 = vsel %vm347, %v2755, 0.0
        %2758 = vadd.xlane.f32.xlu0 %v2757
        %v2759 = vpop.xlane.xlu0 %2758
        %v2760 = vsel %vm347, %v2756, 0.0
        %2761 = vadd.xlane.f32.xlu0 %v2760
        %v2762 = vpop.xlane.xlu0 %2761
        %v2763 = vmul.f32 %v2759, %v354
        %v2764 = vmul.f32 %v2762, %v354
        %v2765 = vadd.f32 %v2763, 1e-12
        %v2766 = vadd.f32 %v2764, 1e-12
        %v2767 = vrsqrt.pop %v2765
        %v2768 = vrsqrt.pop %v2766
        %v2769 = vmul.f32 %v2753, %v2767
        %v2770 = vmul.f32 %v2754, %v2768
        %v2771 = vlaneseq
        %v2772 = vshrl.u32 %v2771, 7
        %v2773 = vsub.s32 6, %v2772
        %v2774 = vrot.slane %v345, %v2773
        %v2775 = vmul.f32 %v2769, %v2774
        %v2776 = vmul.f32 %v2770, %v2774
        %v2777 = vlaneseq
        %v2778 = vshrl.u32 %v2777, 7
        %v2779 = vsub.s32 7, %v2778
        %v2780 = vrot.slane %v345, %v2779
        %v2781 = vadd.f32 %v2775, %v2780
        %v2782 = vadd.f32 %v2776, %v2780
        %v2783 = vld [vmem:[%s279] sm:$0xf]
        %v2784 = vld [vmem:[%s279 + $0x4] sm:$0xf]
        %v2785 = vld [vmem:[%s279 + $0x8] sm:$0xf]
        %v2786 = vld [vmem:[%s279 + $0xc] sm:$0xf]
        %v2787 = vpack.c.bf16 %v2782, %v2781
        %v2788 = vlaneseq
        %v2789 = vshrl.u32 %v2788, 7
        %v2790 = vsub.s32 0, %v2789
        %v2791 = vrot.slane %v346, %v2790
        %v2796 = vunpack.c.l.b16 %v2783
        %v2797 = vunpack.c.l.b16 %v2784
        %v2798 = vunpack.c.l.b16 %v2785
        %v2799 = vunpack.c.l.b16 %v2786
        %v2800 = vpack.c.b16 %v2797, %v2796
        %v2801 = vpack.c.b16 %v2799, %v2798
        %v2805 = vsel %vm347, %v2787, 0
        %2807 = vmatprep.subr.bf16.mxu0 0
        %2808 = vmatpush1.bf16.msra.mxu0 %v2800
        %2809 = vmatprep.subr.bf16.mxu0 0
        %2810 = vmatpush1.bf16.msra.mxu0 %v2801
        %2811 = vmatprep.subr.bf16.mxu0 0
        %2812 = vmatpush1.bf16.msra.mxu0 0
        %2813 = vmatprep.subr.bf16.mxu0 0
        %2814 = vmatpush1.bf16.msra.mxu0 0
        %2815 = vmatprep.subr.bf16.mxu0 0
        %2816 = vmatpush1.bf16.msra.mxu0 0
        %2817 = vmatprep.subr.bf16.mxu0 0
        %2818 = vmatpush1.bf16.msra.mxu0 0
        %2819 = vmatprep.subr.bf16.mxu0 0
        %2820 = vmatpush1.bf16.msra.mxu0 0
        %2821 = vmatprep.subr.bf16.mxu0 0
        %2822 = vmatpush1.bf16.msra.mxu0 0
        %2823 = vmatprep.subr.bf16.mxu0 0
        %2824 = vmatpush1.bf16.msra.mxu0 0
        %2825 = vmatprep.subr.bf16.mxu0 0
        %2826 = vmatpush1.bf16.msra.mxu0 0
        %2827 = vmatprep.subr.bf16.mxu0 0
        %2828 = vmatpush1.bf16.msra.mxu0 0
        %2829 = vmatprep.subr.bf16.mxu0 0
        %2830 = vmatpush1.bf16.msra.mxu0 0
        %2831 = vmatprep.subr.bf16.mxu0 0
        %2832 = vmatpush1.bf16.msra.mxu0 0
        %2833 = vmatprep.subr.bf16.mxu0 0
        %2834 = vmatpush1.bf16.msra.mxu0 0
        %2835 = vmatprep.subr.bf16.mxu0 0
        %2836 = vmatpush1.bf16.msra.mxu0 0
        %2837 = vmatprep.subr.bf16.mxu0 0
        %2838 = vmatpush1.bf16.msra.mxu0 0
        %2839 = vmatprep.mubr.bf16.mxu0 0
        %2840 = vmatmul.mubr.bf16.gmra.mrb[0].mxu0 %v2805
        %v2841 = vpop.f32.mrb[0].mxu0
        %v2842 = vadd.f32 %v2791, %v2841
        %v2843 = vpop.f32.mrb[0].mxu0
        %v2844 = vpop.f32.mrb[0].mxu0
        %v2845 = vadd.f32 %v2791, %v2844
        %v2846 = vpop.f32.mrb[0].mxu0
        %2847 = vdwg.mxu0
        %v2848 = vmax.f32 %v2842, 0.0
        %v2849 = vmax.f32 %v2845, 0.0
        %v2850 = vld [vmem:[%s326] sm:$0xf]
        %v2851 = vld [vmem:[%s326 + $0x4] sm:$0xf]
        %v2852 = vld [vmem:[%s326 + $0x8] sm:$0xf]
        %v2853 = vld [vmem:[%s326 + $0xc] sm:$0xf]
        %v2854 = vld [vmem:[%s326 + $0x10] sm:$0xf]
        %v2855 = vld [vmem:[%s326 + $0x14] sm:$0xf]
        %v2856 = vld [vmem:[%s326 + $0x18] sm:$0xf]
        %v2857 = vld [vmem:[%s326 + $0x1c] sm:$0xf]
        %v2858 = vpack.c.bf16 %v2849, %v2848
        %v2859 = vlaneseq
        %v2860 = vshrl.u32 %v2859, 7
        %v2861 = vsub.s32 1, %v2860
        %v2862 = vrot.slane %v346, %v2861
        %v2871 = vunpack.c.l.b16 %v2850
        %v2872 = vunpack.c.l.b16 %v2851
        %v2873 = vunpack.c.l.b16 %v2852
        %v2874 = vunpack.c.l.b16 %v2853
        %v2875 = vunpack.c.l.b16 %v2854
        %v2876 = vunpack.c.l.b16 %v2855
        %v2877 = vunpack.c.l.b16 %v2856
        %v2878 = vunpack.c.l.b16 %v2857
        %v2879 = vpack.c.b16 %v2872, %v2871
        %v2880 = vpack.c.b16 %v2874, %v2873
        %v2881 = vpack.c.b16 %v2876, %v2875
        %v2882 = vpack.c.b16 %v2878, %v2877
        %vm2887 = vcmask 523264
        %v2889 = vsel %vm2887, %v2858, 0
        %2891 = vmatprep.subr.bf16.mxu0 0
        %2892 = vmatpush1.bf16.msra.mxu0 %v2879
        %2893 = vmatprep.subr.bf16.mxu0 0
        %2894 = vmatpush1.bf16.msra.mxu0 %v2880
        %2895 = vmatprep.subr.bf16.mxu0 0
        %2896 = vmatpush1.bf16.msra.mxu0 %v2881
        %2897 = vmatprep.subr.bf16.mxu0 0
        %2898 = vmatpush1.bf16.msra.mxu0 %v2882
        %2899 = vmatprep.subr.bf16.mxu0 0
        %2900 = vmatpush1.bf16.msra.mxu0 0
        %2901 = vmatprep.subr.bf16.mxu0 0
        %2902 = vmatpush1.bf16.msra.mxu0 0
        %2903 = vmatprep.subr.bf16.mxu0 0
        %2904 = vmatpush1.bf16.msra.mxu0 0
        %2905 = vmatprep.subr.bf16.mxu0 0
        %2906 = vmatpush1.bf16.msra.mxu0 0
        %2907 = vmatprep.subr.bf16.mxu0 0
        %2908 = vmatpush1.bf16.msra.mxu0 0
        %2909 = vmatprep.subr.bf16.mxu0 0
        %2910 = vmatpush1.bf16.msra.mxu0 0
        %2911 = vmatprep.subr.bf16.mxu0 0
        %2912 = vmatpush1.bf16.msra.mxu0 0
        %2913 = vmatprep.subr.bf16.mxu0 0
        %2914 = vmatpush1.bf16.msra.mxu0 0
        %2915 = vmatprep.subr.bf16.mxu0 0
        %2916 = vmatpush1.bf16.msra.mxu0 0
        %2917 = vmatprep.subr.bf16.mxu0 0
        %2918 = vmatpush1.bf16.msra.mxu0 0
        %2919 = vmatprep.subr.bf16.mxu0 0
        %2920 = vmatpush1.bf16.msra.mxu0 0
        %2921 = vmatprep.subr.bf16.mxu0 0
        %2922 = vmatpush1.bf16.msra.mxu0 0
        %2923 = vmatprep.mubr.bf16.mxu0 0
        %2924 = vmatmul.mubr.bf16.gmra.mrb[0].mxu0 %v2889
        %v2925 = vpop.f32.mrb[0].mxu0
        %v2926 = vadd.f32 %v2862, %v2925
        %v2927 = vpop.f32.mrb[0].mxu0
        %v2928 = vpop.f32.mrb[0].mxu0
        %v2929 = vadd.f32 %v2862, %v2928
        %v2930 = vpop.f32.mrb[0].mxu0
        %2931 = vdwg.mxu0
        %v2932 = vadd.f32 %v2926, %v2781
        %v2933 = vadd.f32 %v2929, %v2782
        %2934 = vst.msk [vmem:[#allocation7] sm:$0xff] %vm347, %v2932
        %2935 = vst.msk [vmem:[#allocation7 + $0x8] sm:$0xff] %vm347, %v2933
        // Predicated region
        $region53: #{tpu_custom_call.1} parent=39 // pred_check
          %p2936 = pneg %p181
        $region54: #{tpu_custom_call.1} parent=39 // pred_check_branch
          %2938 = sbr.rel (%p2936) target = $region56
        $region55: #{tpu_custom_call.1} parent=39 // pred_region
          %s2939 = smul.u32 2, %s25
          %s2941 = ssub.s32 256, 256
          %2942 = vsyncadd [#allocation4], %s2941
          %s2943 = smul.addr %s2939, 128
          %s2944 = scalar_lea.hbm %s5, %s2943
          %s2945 = sshll.u32 [#allocation7], 4
          %s2946 = int_to_ptr.vmem [resolvable:$true] %s2945
          %2951 = dma.vmem_to_hbm [thread:$0]  %s2946, 256, %s2944, [#allocation4], 128, 128, 8
        $region56: #{tpu_custom_call.1} parent=39 // pred_fallthru
          _
        // Predicated region
        $region57: #{tpu_custom_call.1} parent=39 // pred_check
          %p2952 = pneg %p181
        $region58: #{tpu_custom_call.1} parent=39 // pred_check_branch
          %2954 = sbr.rel (%p2952) target = $region60
        $region59: #{tpu_custom_call.1} parent=39 // pred_region
          %2955 = dma.done [#allocation4], 256
        $region60: #{tpu_custom_call.1} parent=39 // pred_fallthru
          _
      $region40: #{tpu_custom_call.1} parent=5 // pred_fallthru
        _
      %p2956 = scmp.le.s32.totalorder 2, %s16
      // Predicated region
      $region61: #{tpu_custom_call.1} parent=5 // pred_check
        %p2957 = pneg %p2956
      $region62: #{tpu_custom_call.1} parent=5 // pred_check_branch
        %2959 = sbr.rel (%p2957) target = $region64
      $region63: #{tpu_custom_call.1} parent=5 // pred_region
        %s2960 = ssub.s32 %s16, 2
      $region64: #{tpu_custom_call.1} parent=5 // pred_fallthru
        _
    $region6: #{tpu_custom_call.1} parent=1 // loop_footer
      %s20 = sadd.s32 1, %s16
    $region7: #{tpu_custom_call.1} parent=1 // loop_footer_branch
      %15 = sbr.rel target = $region3
    $region8: #{tpu_custom_call.1} parent=1 // loop_exit
      _
    %2961 = vsyncpa [#allocation3], 1
    %s2962 = scalar_lea.sflag [#allocation3], 1
    %2963 = vsyncpa %s2962, 1
    %2964 = vsyncpa [#allocation6], 1
    %s2965 = scalar_lea.sflag [#allocation6], 1
    %2966 = vsyncpa %s2965, 1
    %2967 = vsyncpa [#allocation4], 1
    %s2968 = scalar_lea.sflag [#allocation4], 1
    %2969 = vsyncpa %s2968, 1

</llo_original>
